<compile_context>
chip_gen: v7x
topology: tpu7x:2x2x1
jax: 0.10.0
libtpu: 0.0.40
codegen_flags: <defaults>
</compile_context>

<pallas_src>
import numpy as np
import jax
import jax.numpy as jnp
from jax import lax
from jax.experimental import pallas as pl
from jax.experimental.pallas import tpu as pltpu

# ----------------------------- model dimensions ------------------------------
EMBED = 32      # embed_size
HIDDEN = 32     # hidden_size
OUTPUT = 64     # output_size (vocab)
NHEAD = 8
NLAYERS = 2
B = 4           # batch
T = 8           # encoder sequence length
K = NHEAD * HIDDEN        # 256, heads packed on lanes
GATES = 3 * HIDDEN        # 96
GPACK = 256               # gi at lanes [0,96), gh at lanes [128,224) (lane-tile aligned)


# ------------------------------- fused kernel --------------------------------
def decoder_fused_kernel(
    inpt_ref,      # VMEM [B, 1] int32          token ids
    embed_ref,     # VMEM [OUTPUT, E]           embedding table
    h_prev_ref,    # VMEM [NLAYERS, B, H]       previous GRU hidden state
    enc_ref,       # VMEM [T, B, H]             encoder outputs (seq-first, untransposed)
    wk_ref,        # VMEM [H, K]                attention key proj (heads on lanes)
    we_ref,        # VMEM [H, K]                attention enc proj (heads on lanes)
    ab_ref,        # VMEM [1, K]                attention bias (heads on lanes)
    vbig_ref,      # VMEM [K, NHEAD*B]          block score vectors, col j = h*B + b
    ffnw_ref,      # VMEM [K, H]
    ffnb_ref,      # VMEM [1, H]
    w0p_ref,       # VMEM [E+2H, GPACK]         [[wih0 0],[0 whh0]] lane-tile aligned
    b0p_ref,       # VMEM [1, GPACK]
    w1p_ref,       # VMEM [2H, GPACK]           [[wih1 0],[0 whh1]]
    b1p_ref,       # VMEM [1, GPACK]
    outw_ref,      # VMEM [H, OUTPUT]
    outb_ref,      # VMEM [1, OUTPUT]
    out_ref,       # out  [B, OUTPUT + NLAYERS*H]   = [logp | h0_new | h1_new]
):
    H = HIDDEN
    f32 = jnp.float32

    # ---- embedding lookup as a one-hot MXU matmul (no serial dynamic slices) ----
    ids = inpt_ref[...]                                                     # [B, 1] int32
    cols = lax.broadcasted_iota(jnp.int32, (B, OUTPUT), 1)
    onehot = (cols == ids).astype(f32)                                      # [B, OUTPUT]
    embedded = jnp.dot(onehot, embed_ref[...], preferred_element_type=f32)  # [B, E]

    # ---- multi-head Bahdanau attention -----------------------------------------
    h_prev = h_prev_ref[...]                                                # [NL, B, H]
    h0_prev = h_prev[0]
    h1_prev = h_prev[1]
    key = jnp.sum(h_prev, axis=0)                                           # last_hidden.sum(0)

    enc2 = enc_ref[...].reshape(T * B, H)                                   # row r = t*B + b (free collapse)
    key_proj = jnp.dot(key, wk_ref[...], preferred_element_type=f32)        # [B, K]
    enc_proj = jnp.dot(enc2, we_ref[...], preferred_element_type=f32)       # [T*B, K]
    energy = jnp.tanh(enc_proj.reshape(T, B, K)
                      + key_proj[None, :, :] + ab_ref[...])                 # [T, B, K]
    energy2 = energy.reshape(T * B, K)                                      # free collapse

    # all heads / all batches in ONE matmul: score[(t,b'), (h,b)] = energy[t,b',:].v_h
    score = jnp.dot(energy2, vbig_ref[...], preferred_element_type=f32)     # [T*B, NHEAD*B]
    rb = lax.broadcasted_iota(jnp.int32, (T * B, NHEAD * B), 0) % B         # row batch b'
    cb = lax.broadcasted_iota(jnp.int32, (T * B, NHEAD * B), 1) % B         # col batch b
    score = jnp.where(rb == cb, score, f32(-1e30))                          # block mask

    # softmax over encoder positions t (valid rows of each column)
    m = jnp.max(score, axis=0, keepdims=True)                               # [1, NHEAD*B]
    ex = jnp.exp(score - m)
    denom = jnp.sum(ex, axis=0, keepdims=True)
    alpha = ex * pl.reciprocal(denom, approx=False)                         # exact; block-diag

    # per-head contexts: ONE block-structured matmul -> rows j = h*B + b
    ctx_blk = jnp.dot(alpha.T, enc2, preferred_element_type=f32)            # [NHEAD*B, H]

    # ---- FFN over the head-concatenated context: one lane-dense matmul ----------
    ctx_flat = jnp.concatenate(
        [ctx_blk[h * B:(h + 1) * B, :] for h in range(NHEAD)], axis=1)      # [B, NHEAD*H]
    ctx = jnp.tanh(jnp.dot(ctx_flat, ffnw_ref[...], preferred_element_type=f32)
                   + ffnb_ref[...])                                         # [B, H]

    # ---- 2-layer GRU cell, single time step; one MXU push per layer -------------
    def gru_layer(lhs, w_ref, b_ref, h_old):
        g = jnp.dot(lhs, w_ref[...], preferred_element_type=f32) + b_ref[...]   # [B, GPACK]
        gi = g[:, 0:GATES]                                                       # x @ Wih + bih
        gh = g[:, 128:128 + GATES]                                               # h @ Whh + bhh
        r = jax.nn.sigmoid(gi[:, :H] + gh[:, :H])
        z = jax.nn.sigmoid(gi[:, H:2 * H] + gh[:, H:2 * H])
        n = jnp.tanh(gi[:, 2 * H:] + r * gh[:, 2 * H:])                          # PyTorch n-gate
        return (1.0 - z) * n + z * h_old

    lhs0 = jnp.concatenate([embedded, ctx, h0_prev], axis=1)                # [B, E+2H]
    h0_new = gru_layer(lhs0, w0p_ref, b0p_ref, h0_prev)
    lhs1 = jnp.concatenate([h0_new, h1_prev], axis=1)                       # [B, 2H]
    h1_new = gru_layer(lhs1, w1p_ref, b1p_ref, h1_prev)

    # ---- output projection + log_softmax ----------------------------------------
    logits = jnp.dot(h1_new, outw_ref[...], preferred_element_type=f32) + outb_ref[...]
    mx = jnp.max(logits, axis=-1, keepdims=True)
    s = logits - mx
    lse = jnp.log(jnp.sum(jnp.exp(s), axis=-1, keepdims=True))
    logp = s - lse                                                          # [B, OUTPUT]

    # lane-dense packed store: [logp | h0 | h1] -> 128 lanes, one unmasked vst
    out_ref[...] = jnp.concatenate([logp, h0_new, h1_new], axis=1)


# ------------------------------ wrapper / packing -----------------------------
def pack_params(p):
    """One-time repack of parameters into MXU/lane-friendly shapes (pure JAX)."""
    H, NH, E, G = HIDDEN, NHEAD, EMBED, GATES
    # attention projections: heads packed along lanes
    wk = jnp.transpose(p["attn_w"][:, :H, :], (1, 0, 2)).reshape(H, K)
    we = jnp.transpose(p["attn_w"][:, H:, :], (1, 0, 2)).reshape(H, K)
    ab = p["attn_b"].reshape(1, K)
    # block score vectors: column j = h*B + b all equal to v_h (batch baked in)
    eye = jnp.eye(NH, dtype=jnp.float32)
    vblk = (eye[:, :, None] * p["attn_v"][None, :, :]).reshape(NH, K)       # [NH, K]
    vbigT = jnp.repeat(vblk.T, B, axis=1)                                    # [K, NH*B]

    def pack_gru(wih, whh, bih, bhh):
        din = wih.shape[0] + whh.shape[0]
        w = jnp.zeros((din, GPACK), jnp.float32)
        w = w.at[:wih.shape[0], 0:G].set(wih)
        w = w.at[wih.shape[0]:, 128:128 + G].set(whh)
        b = jnp.zeros((1, GPACK), jnp.float32)
        b = b.at[:, 0:G].set(bih)
        b = b.at[:, 128:128 + G].set(bhh)
        return w, b

    w0p, b0p = pack_gru(p["wih0"], p["whh0"], p["bih0"], p["bhh0"])
    w1p, b1p = pack_gru(p["wih1"], p["whh1"], p["bih1"], p["bhh1"])
    return {
        "embed": p["embed"],
        "wk": wk, "we": we, "ab": ab, "vbigT": vbigT,
        "ffn_w": p["ffn_w"], "ffn_b": p["ffn_b"],
        "w0p": w0p, "b0p": b0p, "w1p": w1p, "b1p": b1p,
        "out_w": p["out_w"], "out_b": p["out_b"],
    }


@jax.jit
def decoder_forward(pp, inpt, last_hidden, encoder_outputs):
    """inpt [B] int32, last_hidden [NLAYERS,B,H], encoder_outputs [T,B,H] (seq-first)."""
    vmem = pltpu.MemorySpace.VMEM
    args = (
        inpt.astype(jnp.int32)[:, None],          # [B,1] -> VMEM for the one-hot compare
        pp["embed"], last_hidden, encoder_outputs,  # no wrapper transpose of enc
        pp["wk"], pp["we"], pp["ab"], pp["vbigT"],
        pp["ffn_w"], pp["ffn_b"],
        pp["w0p"], pp["b0p"], pp["w1p"], pp["b1p"],
        pp["out_w"], pp["out_b"],
    )
    packed = pl.pallas_call(
        decoder_fused_kernel,
        out_shape=jax.ShapeDtypeStruct((B, OUTPUT + NLAYERS * HIDDEN), jnp.float32),
        in_specs=[pl.BlockSpec(memory_space=vmem)] * len(args),
        out_specs=pl.BlockSpec(memory_space=vmem),
    )(*args)
    logp = packed[:, :OUTPUT]
    hidden = jnp.stack([packed[:, OUTPUT:OUTPUT + HIDDEN],
                        packed[:, OUTPUT + HIDDEN:]], axis=0)
    return logp, hidden


# ------------------------------ pure-JAX reference ----------------------------
def reference_forward(params, inpt, last_hidden, encoder_outputs):
    H = HIDDEN
    embedded = jnp.take(params["embed"], inpt, axis=0)
    key = jnp.sum(last_hidden, axis=0)
    enc = jnp.transpose(encoder_outputs, (1, 0, 2))               # [B, T, H]
    ctxs = []
    for h in range(NHEAD):
        w, b, v = params["attn_w"][h], params["attn_b"][h], params["attn_v"][h]
        cat = jnp.concatenate([jnp.broadcast_to(key[:, None, :], enc.shape), enc], axis=-1)
        energy = jnp.tanh(cat @ w + b)
        score = jnp.sum(energy * v, axis=-1)
        alpha = jax.nn.softmax(score, axis=-1)
        ctxs.append(jnp.einsum("bt,bth->bh", alpha, enc))
    ctx_flat = jnp.concatenate(ctxs, axis=-1)
    ctx = jnp.tanh(ctx_flat @ params["ffn_w"] + params["ffn_b"][0])
    x0 = jnp.concatenate([embedded, ctx], axis=-1)

    def cell(x, h, wih, whh, bih, bhh):
        gi = x @ wih + bih[0]
        gh = h @ whh + bhh[0]
        r = jax.nn.sigmoid(gi[:, :H] + gh[:, :H])
        z = jax.nn.sigmoid(gi[:, H:2 * H] + gh[:, H:2 * H])
        n = jnp.tanh(gi[:, 2 * H:] + r * gh[:, 2 * H:])
        return (1 - z) * n + z * h

    h0 = cell(x0, last_hidden[0], params["wih0"], params["whh0"], params["bih0"], params["bhh0"])
    h1 = cell(h0, last_hidden[1], params["wih1"], params["whh1"], params["bih1"], params["bhh1"])
    logits = h1 @ params["out_w"] + params["out_b"][0]
    return jax.nn.log_softmax(logits, axis=-1), jnp.stack([h0, h1])


# ------------------------------ param construction ----------------------------
def make_params(rng):
    def nrm(key, shape, scale):
        return (scale * jax.random.normal(key, shape)).astype(jnp.float32)

    ks = jax.random.split(rng, 16)
    return {
        "embed":  nrm(ks[0], (OUTPUT, EMBED), 0.1),
        # attention heads (weights stored transposed for x @ W)
        "attn_w": nrm(ks[1], (NHEAD, 2 * HIDDEN, HIDDEN), 0.2),
        "attn_b": nrm(ks[2], (NHEAD, HIDDEN), 0.05),
        "attn_v": nrm(ks[3], (NHEAD, HIDDEN), 0.2),
        # ffn: Linear(nhead*H -> H)
        "ffn_w":  nrm(ks[4], (NHEAD * HIDDEN, HIDDEN), 0.1),
        "ffn_b":  nrm(ks[5], (1, HIDDEN), 0.05),
        # GRU layer 0 (input = E + H); biases zero per init_weight()
        "wih0":   nrm(ks[6], (EMBED + HIDDEN, 3 * HIDDEN), 0.15),
        "whh0":   nrm(ks[7], (HIDDEN, 3 * HIDDEN), 0.15),
        "bih0":   jnp.zeros((1, 3 * HIDDEN), jnp.float32),
        "bhh0":   jnp.zeros((1, 3 * HIDDEN), jnp.float32),
        # GRU layer 1 (input = H)
        "wih1":   nrm(ks[8], (HIDDEN, 3 * HIDDEN), 0.15),
        "whh1":   nrm(ks[9], (HIDDEN, 3 * HIDDEN), 0.15),
        "bih1":   nrm(ks[10], (1, 3 * HIDDEN), 0.05),
        "bhh1":   nrm(ks[11], (1, 3 * HIDDEN), 0.05),
        # out: Linear(H -> output_size)
        "out_w":  nrm(ks[12], (HIDDEN, OUTPUT), 0.15),
        "out_b":  nrm(ks[13], (1, OUTPUT), 0.05),
    }


# ------------------------------------ main ------------------------------------
if __name__ == "__main__":
    root = jax.random.PRNGKey(0)
    kp, ki, kh, ke = jax.random.split(root, 4)

    params = make_params(kp)
    packed_params = pack_params(params)

    inpt = jax.random.randint(ki, (B,), 0, OUTPUT, dtype=jnp.int32)           # token ids
    last_hidden = (0.3 * jax.random.normal(kh, (NLAYERS, B, HIDDEN))).astype(jnp.float32)
    encoder_outputs = (0.3 * jax.random.normal(ke, (T, B, HIDDEN))).astype(jnp.float32)

    logp, hidden = decoder_forward(packed_params, inpt, last_hidden, encoder_outputs)
    jax.block_until_ready((logp, hidden))

    logp_ref, hidden_ref = reference_forward(params, inpt, last_hidden, encoder_outputs)
    np.testing.assert_allclose(np.asarray(logp), np.asarray(logp_ref), rtol=2e-3, atol=2e-3)
    np.testing.assert_allclose(np.asarray(hidden), np.asarray(hidden_ref), rtol=2e-3, atol=2e-3)
    assert logp.shape == (B, OUTPUT) and hidden.shape == (NLAYERS, B, HIDDEN)

    print("KERNEL_OK")
</pallas_src>

<mosaic_0001>
module attributes {stable_mosaic.version = 11 : i64} {
  func.func @decoder_fused_kernel(%arg0: memref<4x1xi32, #tpu.memory_space<vmem>>, %arg1: memref<64x32xf32, #tpu.memory_space<vmem>>, %arg2: memref<2x4x32xf32, #tpu.memory_space<vmem>>, %arg3: memref<8x4x32xf32, #tpu.memory_space<vmem>>, %arg4: memref<32x256xf32, #tpu.memory_space<vmem>>, %arg5: memref<32x256xf32, #tpu.memory_space<vmem>>, %arg6: memref<1x256xf32, #tpu.memory_space<vmem>>, %arg7: memref<256x32xf32, #tpu.memory_space<vmem>>, %arg8: memref<256x32xf32, #tpu.memory_space<vmem>>, %arg9: memref<1x32xf32, #tpu.memory_space<vmem>>, %arg10: memref<96x256xf32, #tpu.memory_space<vmem>>, %arg11: memref<1x256xf32, #tpu.memory_space<vmem>>, %arg12: memref<64x256xf32, #tpu.memory_space<vmem>>, %arg13: memref<1x256xf32, #tpu.memory_space<vmem>>, %arg14: memref<32x64xf32, #tpu.memory_space<vmem>>, %arg15: memref<1x64xf32, #tpu.memory_space<vmem>>, %arg16: memref<4x128xf32, #tpu.memory_space<vmem>>) attributes {dimension_semantics = [], scalar_prefetch = 0 : i64, scratch_operands = 0 : i64, tpu.core_type = #tpu.core_type<tc>} {
    %c0 = arith.constant 0 : index
    %c0_0 = arith.constant 0 : index
    %0 = vector.load %arg0[%c0, %c0_0] : memref<4x1xi32, #tpu.memory_space<vmem>>, vector<4x1xi32>
    %1 = tpu.iota {dimensions = array<i32: 1>} : vector<4x64xi32>
    %2 = vector.broadcast %0 : vector<4x1xi32> to vector<4x64xi32>
    %3 = arith.cmpi eq, %1, %2 : vector<4x64xi32>
    %4 = arith.extui %3 : vector<4x64xi1> to vector<4x64xi32>
    %5 = arith.sitofp %4 : vector<4x64xi32> to vector<4x64xf32>
    %c0_1 = arith.constant 0 : index
    %c0_2 = arith.constant 0 : index
    %6 = vector.load %arg1[%c0_1, %c0_2] : memref<64x32xf32, #tpu.memory_space<vmem>>, vector<64x32xf32>
    %cst = arith.constant dense<0.000000e+00> : vector<4x32xf32>
    %7 = tpu.matmul %5, %6, %cst {dimension_numbers = #tpu.dot_dimension_numbers<[1], [0], [0], [1], [0, 0, 1, 1], [], []>} : vector<4x64xf32>, vector<64x32xf32>, vector<4x32xf32> -> vector<4x32xf32>
    %c0_3 = arith.constant 0 : index
    %c0_4 = arith.constant 0 : index
    %c0_5 = arith.constant 0 : index
    %8 = vector.load %arg2[%c0_3, %c0_4, %c0_5] : memref<2x4x32xf32, #tpu.memory_space<vmem>>, vector<2x4x32xf32>
    %9 = vector.extract_strided_slice %8 {offsets = [0, 0, 0], sizes = [1, 4, 32], strides = [1, 1, 1]} : vector<2x4x32xf32> to vector<1x4x32xf32>
    %10 = vector.shape_cast %9 : vector<1x4x32xf32> to vector<4x32xf32>
    %11 = vector.extract_strided_slice %8 {offsets = [1, 0, 0], sizes = [1, 4, 32], strides = [1, 1, 1]} : vector<2x4x32xf32> to vector<1x4x32xf32>
    %12 = vector.shape_cast %11 : vector<1x4x32xf32> to vector<4x32xf32>
    %cst_6 = arith.constant dense<0.000000e+00> : vector<4x32xf32>
    %13 = vector.multi_reduction <add>, %8, %cst_6 [0] : vector<2x4x32xf32> to vector<4x32xf32>
    %c0_7 = arith.constant 0 : index
    %c0_8 = arith.constant 0 : index
    %c0_9 = arith.constant 0 : index
    %14 = vector.load %arg3[%c0_7, %c0_8, %c0_9] : memref<8x4x32xf32, #tpu.memory_space<vmem>>, vector<8x4x32xf32>
    %15 = vector.shape_cast %14 : vector<8x4x32xf32> to vector<32x32xf32>
    %c0_10 = arith.constant 0 : index
    %c0_11 = arith.constant 0 : index
    %16 = vector.load %arg4[%c0_10, %c0_11] : memref<32x256xf32, #tpu.memory_space<vmem>>, vector<32x256xf32>
    %cst_12 = arith.constant dense<0.000000e+00> : vector<4x256xf32>
    %17 = tpu.matmul %13, %16, %cst_12 {dimension_numbers = #tpu.dot_dimension_numbers<[1], [0], [0], [1], [0, 0, 1, 1], [], []>} : vector<4x32xf32>, vector<32x256xf32>, vector<4x256xf32> -> vector<4x256xf32>
    %c0_13 = arith.constant 0 : index
    %c0_14 = arith.constant 0 : index
    %18 = vector.load %arg5[%c0_13, %c0_14] : memref<32x256xf32, #tpu.memory_space<vmem>>, vector<32x256xf32>
    %cst_15 = arith.constant dense<0.000000e+00> : vector<32x256xf32>
    %19 = tpu.matmul %15, %18, %cst_15 {dimension_numbers = #tpu.dot_dimension_numbers<[1], [0], [0], [1], [0, 0, 1, 1], [], []>} : vector<32x32xf32>, vector<32x256xf32>, vector<32x256xf32> -> vector<32x256xf32>
    %20 = vector.shape_cast %19 : vector<32x256xf32> to vector<8x4x256xf32>
    %21 = vector.shape_cast %17 : vector<4x256xf32> to vector<1x4x256xf32>
    %22 = vector.broadcast %21 : vector<1x4x256xf32> to vector<8x4x256xf32>
    %23 = arith.addf %20, %22 : vector<8x4x256xf32>
    %c0_16 = arith.constant 0 : index
    %c0_17 = arith.constant 0 : index
    %24 = vector.load %arg6[%c0_16, %c0_17] : memref<1x256xf32, #tpu.memory_space<vmem>>, vector<1x256xf32>
    %25 = vector.shape_cast %24 : vector<1x256xf32> to vector<1x1x256xf32>
    %26 = vector.broadcast %25 : vector<1x1x256xf32> to vector<8x4x256xf32>
    %27 = arith.addf %23, %26 : vector<8x4x256xf32>
    %28 = math.tanh %27 : vector<8x4x256xf32>
    %29 = vector.shape_cast %28 : vector<8x4x256xf32> to vector<32x256xf32>
    %c0_18 = arith.constant 0 : index
    %c0_19 = arith.constant 0 : index
    %30 = vector.load %arg7[%c0_18, %c0_19] : memref<256x32xf32, #tpu.memory_space<vmem>>, vector<256x32xf32>
    %cst_20 = arith.constant dense<0.000000e+00> : vector<32x32xf32>
    %31 = tpu.matmul %29, %30, %cst_20 {dimension_numbers = #tpu.dot_dimension_numbers<[1], [0], [0], [1], [0, 0, 1, 1], [], []>} : vector<32x256xf32>, vector<256x32xf32>, vector<32x32xf32> -> vector<32x32xf32>
    %32 = tpu.iota {dimensions = array<i32: 0>} : vector<32x32xi32>
    %c4_i32 = arith.constant 4 : i32
    %c0_i32 = arith.constant 0 : i32
    %33 = arith.cmpi eq, %c4_i32, %c0_i32 : i32
    %c1_i32 = arith.constant 1 : i32
    %34 = arith.select %33, %c1_i32, %c4_i32 : i32
    %35 = vector.broadcast %34 : i32 to vector<32x32xi32>
    %36 = arith.remsi %32, %35 : vector<32x32xi32>
    %c0_i32_21 = arith.constant 0 : i32
    %37 = vector.broadcast %c0_i32_21 : i32 to vector<32x32xi32>
    %38 = arith.cmpi ne, %36, %37 : vector<32x32xi32>
    %c0_i32_22 = arith.constant 0 : i32
    %39 = vector.broadcast %c0_i32_22 : i32 to vector<32x32xi32>
    %40 = arith.cmpi slt, %36, %39 : vector<32x32xi32>
    %c0_i32_23 = arith.constant 0 : i32
    %41 = arith.cmpi slt, %34, %c0_i32_23 : i32
    %42 = vector.broadcast %41 : i1 to vector<32x32xi1>
    %43 = vector.broadcast %42 : vector<32x32xi1> to vector<32x32xi1>
    %44 = arith.xori %40, %43 : vector<32x32xi1>
    %45 = arith.andi %44, %38 : vector<32x32xi1>
    %46 = vector.broadcast %34 : i32 to vector<32x32xi32>
    %47 = arith.addi %36, %46 : vector<32x32xi32>
    %48 = arith.select %45, %47, %36 : vector<32x32xi1>, vector<32x32xi32>
    %49 = tpu.iota {dimensions = array<i32: 1>} : vector<32x32xi32>
    %c4_i32_24 = arith.constant 4 : i32
    %c0_i32_25 = arith.constant 0 : i32
    %50 = arith.cmpi eq, %c4_i32_24, %c0_i32_25 : i32
    %c1_i32_26 = arith.constant 1 : i32
    %51 = arith.select %50, %c1_i32_26, %c4_i32_24 : i32
    %52 = vector.broadcast %51 : i32 to vector<32x32xi32>
    %53 = arith.remsi %49, %52 : vector<32x32xi32>
    %c0_i32_27 = arith.constant 0 : i32
    %54 = vector.broadcast %c0_i32_27 : i32 to vector<32x32xi32>
    %55 = arith.cmpi ne, %53, %54 : vector<32x32xi32>
    %c0_i32_28 = arith.constant 0 : i32
    %56 = vector.broadcast %c0_i32_28 : i32 to vector<32x32xi32>
    %57 = arith.cmpi slt, %53, %56 : vector<32x32xi32>
    %c0_i32_29 = arith.constant 0 : i32
    %58 = arith.cmpi slt, %51, %c0_i32_29 : i32
    %59 = vector.broadcast %58 : i1 to vector<32x32xi1>
    %60 = vector.broadcast %59 : vector<32x32xi1> to vector<32x32xi1>
    %61 = arith.xori %57, %60 : vector<32x32xi1>
    %62 = arith.andi %61, %55 : vector<32x32xi1>
    %63 = vector.broadcast %51 : i32 to vector<32x32xi32>
    %64 = arith.addi %53, %63 : vector<32x32xi32>
    %65 = arith.select %62, %64, %53 : vector<32x32xi1>, vector<32x32xi32>
    %66 = arith.cmpi eq, %48, %65 : vector<32x32xi32>
    %cst_30 = arith.constant -1.000000e+30 : f32
    %67 = vector.broadcast %cst_30 : f32 to vector<32x32xf32>
    %68 = arith.select %66, %31, %67 : vector<32x32xi1>, vector<32x32xf32>
    %cst_31 = arith.constant dense<0xFF800000> : vector<32xf32>
    %69 = vector.multi_reduction <maximumf>, %68, %cst_31 [0] : vector<32x32xf32> to vector<32xf32>
    %70 = vector.shape_cast %69 : vector<32xf32> to vector<1x32xf32>
    %71 = vector.broadcast %70 : vector<1x32xf32> to vector<32x32xf32>
    %72 = arith.subf %68, %71 : vector<32x32xf32>
    %73 = math.exp %72 : vector<32x32xf32>
    %cst_32 = arith.constant dense<0.000000e+00> : vector<32xf32>
    %74 = vector.multi_reduction <add>, %73, %cst_32 [0] : vector<32x32xf32> to vector<32xf32>
    %75 = vector.shape_cast %74 : vector<32xf32> to vector<1x32xf32>
    %76 = tpu.reciprocal %75 : vector<1x32xf32> -> vector<1x32xf32>
    %77 = vector.broadcast %76 : vector<1x32xf32> to vector<32x32xf32>
    %78 = arith.mulf %73, %77 : vector<32x32xf32>
    %79 = tpu.transpose %78, [1, 0] : vector<32x32xf32> -> vector<32x32xf32>
    %cst_33 = arith.constant dense<0.000000e+00> : vector<32x32xf32>
    %80 = tpu.matmul %79, %15, %cst_33 {dimension_numbers = #tpu.dot_dimension_numbers<[1], [0], [0], [1], [0, 0, 1, 1], [], []>} : vector<32x32xf32>, vector<32x32xf32>, vector<32x32xf32> -> vector<32x32xf32>
    %81 = vector.extract_strided_slice %80 {offsets = [0, 0], sizes = [4, 32], strides = [1, 1]} : vector<32x32xf32> to vector<4x32xf32>
    %82 = vector.extract_strided_slice %80 {offsets = [4, 0], sizes = [4, 32], strides = [1, 1]} : vector<32x32xf32> to vector<4x32xf32>
    %83 = vector.extract_strided_slice %80 {offsets = [8, 0], sizes = [4, 32], strides = [1, 1]} : vector<32x32xf32> to vector<4x32xf32>
    %84 = vector.extract_strided_slice %80 {offsets = [12, 0], sizes = [4, 32], strides = [1, 1]} : vector<32x32xf32> to vector<4x32xf32>
    %85 = vector.extract_strided_slice %80 {offsets = [16, 0], sizes = [4, 32], strides = [1, 1]} : vector<32x32xf32> to vector<4x32xf32>
    %86 = vector.extract_strided_slice %80 {offsets = [20, 0], sizes = [4, 32], strides = [1, 1]} : vector<32x32xf32> to vector<4x32xf32>
    %87 = vector.extract_strided_slice %80 {offsets = [24, 0], sizes = [4, 32], strides = [1, 1]} : vector<32x32xf32> to vector<4x32xf32>
    %88 = vector.extract_strided_slice %80 {offsets = [28, 0], sizes = [4, 32], strides = [1, 1]} : vector<32x32xf32> to vector<4x32xf32>
    %89 = tpu.concatenate %81, %82, %83, %84, %85, %86, %87, %88 in 1 : vector<4x32xf32>, vector<4x32xf32>, vector<4x32xf32>, vector<4x32xf32>, vector<4x32xf32>, vector<4x32xf32>, vector<4x32xf32>, vector<4x32xf32> -> vector<4x256xf32>
    %c0_34 = arith.constant 0 : index
    %c0_35 = arith.constant 0 : index
    %90 = vector.load %arg8[%c0_34, %c0_35] : memref<256x32xf32, #tpu.memory_space<vmem>>, vector<256x32xf32>
    %cst_36 = arith.constant dense<0.000000e+00> : vector<4x32xf32>
    %91 = tpu.matmul %89, %90, %cst_36 {dimension_numbers = #tpu.dot_dimension_numbers<[1], [0], [0], [1], [0, 0, 1, 1], [], []>} : vector<4x256xf32>, vector<256x32xf32>, vector<4x32xf32> -> vector<4x32xf32>
    %c0_37 = arith.constant 0 : index
    %c0_38 = arith.constant 0 : index
    %92 = vector.load %arg9[%c0_37, %c0_38] : memref<1x32xf32, #tpu.memory_space<vmem>>, vector<1x32xf32>
    %93 = vector.broadcast %92 : vector<1x32xf32> to vector<4x32xf32>
    %94 = arith.addf %91, %93 : vector<4x32xf32>
    %95 = math.tanh %94 : vector<4x32xf32>
    %96 = tpu.concatenate %7, %95, %10 in 1 : vector<4x32xf32>, vector<4x32xf32>, vector<4x32xf32> -> vector<4x96xf32>
    %c0_39 = arith.constant 0 : index
    %c0_40 = arith.constant 0 : index
    %97 = vector.load %arg10[%c0_39, %c0_40] : memref<96x256xf32, #tpu.memory_space<vmem>>, vector<96x256xf32>
    %cst_41 = arith.constant dense<0.000000e+00> : vector<4x256xf32>
    %98 = tpu.matmul %96, %97, %cst_41 {dimension_numbers = #tpu.dot_dimension_numbers<[1], [0], [0], [1], [0, 0, 1, 1], [], []>} : vector<4x96xf32>, vector<96x256xf32>, vector<4x256xf32> -> vector<4x256xf32>
    %c0_42 = arith.constant 0 : index
    %c0_43 = arith.constant 0 : index
    %99 = vector.load %arg11[%c0_42, %c0_43] : memref<1x256xf32, #tpu.memory_space<vmem>>, vector<1x256xf32>
    %100 = vector.broadcast %99 : vector<1x256xf32> to vector<4x256xf32>
    %101 = arith.addf %98, %100 : vector<4x256xf32>
    %102 = vector.extract_strided_slice %101 {offsets = [0, 0], sizes = [4, 96], strides = [1, 1]} : vector<4x256xf32> to vector<4x96xf32>
    %103 = vector.extract_strided_slice %101 {offsets = [0, 128], sizes = [4, 96], strides = [1, 1]} : vector<4x256xf32> to vector<4x96xf32>
    %104 = vector.extract_strided_slice %102 {offsets = [0, 0], sizes = [4, 32], strides = [1, 1]} : vector<4x96xf32> to vector<4x32xf32>
    %105 = vector.extract_strided_slice %103 {offsets = [0, 0], sizes = [4, 32], strides = [1, 1]} : vector<4x96xf32> to vector<4x32xf32>
    %106 = arith.addf %104, %105 : vector<4x32xf32>
    %107 = arith.negf %106 : vector<4x32xf32>
    %108 = math.exp %107 : vector<4x32xf32>
    %cst_44 = arith.constant 1.000000e+00 : f32
    %109 = vector.broadcast %cst_44 : f32 to vector<4x32xf32>
    %110 = arith.addf %109, %108 : vector<4x32xf32>
    %111 = arith.divf %109, %110 : vector<4x32xf32>
    %112 = vector.extract_strided_slice %102 {offsets = [0, 32], sizes = [4, 32], strides = [1, 1]} : vector<4x96xf32> to vector<4x32xf32>
    %113 = vector.extract_strided_slice %103 {offsets = [0, 32], sizes = [4, 32], strides = [1, 1]} : vector<4x96xf32> to vector<4x32xf32>
    %114 = arith.addf %112, %113 : vector<4x32xf32>
    %115 = arith.negf %114 : vector<4x32xf32>
    %116 = math.exp %115 : vector<4x32xf32>
    %cst_45 = arith.constant 1.000000e+00 : f32
    %117 = vector.broadcast %cst_45 : f32 to vector<4x32xf32>
    %118 = arith.addf %117, %116 : vector<4x32xf32>
    %119 = arith.divf %117, %118 : vector<4x32xf32>
    %120 = vector.extract_strided_slice %102 {offsets = [0, 64], sizes = [4, 32], strides = [1, 1]} : vector<4x96xf32> to vector<4x32xf32>
    %121 = vector.extract_strided_slice %103 {offsets = [0, 64], sizes = [4, 32], strides = [1, 1]} : vector<4x96xf32> to vector<4x32xf32>
    %122 = arith.mulf %111, %121 : vector<4x32xf32>
    %123 = arith.addf %120, %122 : vector<4x32xf32>
    %124 = math.tanh %123 : vector<4x32xf32>
    %cst_46 = arith.constant 1.000000e+00 : f32
    %125 = vector.broadcast %cst_46 : f32 to vector<4x32xf32>
    %126 = arith.subf %125, %119 : vector<4x32xf32>
    %127 = arith.mulf %126, %124 : vector<4x32xf32>
    %128 = arith.mulf %119, %10 : vector<4x32xf32>
    %129 = arith.addf %127, %128 : vector<4x32xf32>
    %130 = tpu.concatenate %129, %12 in 1 : vector<4x32xf32>, vector<4x32xf32> -> vector<4x64xf32>
    %c0_47 = arith.constant 0 : index
    %c0_48 = arith.constant 0 : index
    %131 = vector.load %arg12[%c0_47, %c0_48] : memref<64x256xf32, #tpu.memory_space<vmem>>, vector<64x256xf32>
    %cst_49 = arith.constant dense<0.000000e+00> : vector<4x256xf32>
    %132 = tpu.matmul %130, %131, %cst_49 {dimension_numbers = #tpu.dot_dimension_numbers<[1], [0], [0], [1], [0, 0, 1, 1], [], []>} : vector<4x64xf32>, vector<64x256xf32>, vector<4x256xf32> -> vector<4x256xf32>
    %c0_50 = arith.constant 0 : index
    %c0_51 = arith.constant 0 : index
    %133 = vector.load %arg13[%c0_50, %c0_51] : memref<1x256xf32, #tpu.memory_space<vmem>>, vector<1x256xf32>
    %134 = vector.broadcast %133 : vector<1x256xf32> to vector<4x256xf32>
    %135 = arith.addf %132, %134 : vector<4x256xf32>
    %136 = vector.extract_strided_slice %135 {offsets = [0, 0], sizes = [4, 96], strides = [1, 1]} : vector<4x256xf32> to vector<4x96xf32>
    %137 = vector.extract_strided_slice %135 {offsets = [0, 128], sizes = [4, 96], strides = [1, 1]} : vector<4x256xf32> to vector<4x96xf32>
    %138 = vector.extract_strided_slice %136 {offsets = [0, 0], sizes = [4, 32], strides = [1, 1]} : vector<4x96xf32> to vector<4x32xf32>
    %139 = vector.extract_strided_slice %137 {offsets = [0, 0], sizes = [4, 32], strides = [1, 1]} : vector<4x96xf32> to vector<4x32xf32>
    %140 = arith.addf %138, %139 : vector<4x32xf32>
    %141 = arith.negf %140 : vector<4x32xf32>
    %142 = math.exp %141 : vector<4x32xf32>
    %cst_52 = arith.constant 1.000000e+00 : f32
    %143 = vector.broadcast %cst_52 : f32 to vector<4x32xf32>
    %144 = arith.addf %143, %142 : vector<4x32xf32>
    %145 = arith.divf %143, %144 : vector<4x32xf32>
    %146 = vector.extract_strided_slice %136 {offsets = [0, 32], sizes = [4, 32], strides = [1, 1]} : vector<4x96xf32> to vector<4x32xf32>
    %147 = vector.extract_strided_slice %137 {offsets = [0, 32], sizes = [4, 32], strides = [1, 1]} : vector<4x96xf32> to vector<4x32xf32>
    %148 = arith.addf %146, %147 : vector<4x32xf32>
    %149 = arith.negf %148 : vector<4x32xf32>
    %150 = math.exp %149 : vector<4x32xf32>
    %cst_53 = arith.constant 1.000000e+00 : f32
    %151 = vector.broadcast %cst_53 : f32 to vector<4x32xf32>
    %152 = arith.addf %151, %150 : vector<4x32xf32>
    %153 = arith.divf %151, %152 : vector<4x32xf32>
    %154 = vector.extract_strided_slice %136 {offsets = [0, 64], sizes = [4, 32], strides = [1, 1]} : vector<4x96xf32> to vector<4x32xf32>
    %155 = vector.extract_strided_slice %137 {offsets = [0, 64], sizes = [4, 32], strides = [1, 1]} : vector<4x96xf32> to vector<4x32xf32>
    %156 = arith.mulf %145, %155 : vector<4x32xf32>
    %157 = arith.addf %154, %156 : vector<4x32xf32>
    %158 = math.tanh %157 : vector<4x32xf32>
    %cst_54 = arith.constant 1.000000e+00 : f32
    %159 = vector.broadcast %cst_54 : f32 to vector<4x32xf32>
    %160 = arith.subf %159, %153 : vector<4x32xf32>
    %161 = arith.mulf %160, %158 : vector<4x32xf32>
    %162 = arith.mulf %153, %12 : vector<4x32xf32>
    %163 = arith.addf %161, %162 : vector<4x32xf32>
    %c0_55 = arith.constant 0 : index
    %c0_56 = arith.constant 0 : index
    %164 = vector.load %arg14[%c0_55, %c0_56] : memref<32x64xf32, #tpu.memory_space<vmem>>, vector<32x64xf32>
    %cst_57 = arith.constant dense<0.000000e+00> : vector<4x64xf32>
    %165 = tpu.matmul %163, %164, %cst_57 {dimension_numbers = #tpu.dot_dimension_numbers<[1], [0], [0], [1], [0, 0, 1, 1], [], []>} : vector<4x32xf32>, vector<32x64xf32>, vector<4x64xf32> -> vector<4x64xf32>
    %c0_58 = arith.constant 0 : index
    %c0_59 = arith.constant 0 : index
    %166 = vector.load %arg15[%c0_58, %c0_59] : memref<1x64xf32, #tpu.memory_space<vmem>>, vector<1x64xf32>
    %167 = vector.broadcast %166 : vector<1x64xf32> to vector<4x64xf32>
    %168 = arith.addf %165, %167 : vector<4x64xf32>
    %cst_60 = arith.constant dense<0xFF800000> : vector<4xf32>
    %169 = vector.multi_reduction <maximumf>, %168, %cst_60 [1] : vector<4x64xf32> to vector<4xf32>
    %170 = vector.shape_cast %169 : vector<4xf32> to vector<4x1xf32>
    %171 = vector.broadcast %170 : vector<4x1xf32> to vector<4x64xf32>
    %172 = arith.subf %168, %171 : vector<4x64xf32>
    %173 = math.exp %172 : vector<4x64xf32>
    %cst_61 = arith.constant dense<0.000000e+00> : vector<4xf32>
    %174 = vector.multi_reduction <add>, %173, %cst_61 [1] : vector<4x64xf32> to vector<4xf32>
    %175 = vector.shape_cast %174 : vector<4xf32> to vector<4x1xf32>
    %176 = math.log %175 : vector<4x1xf32>
    %177 = vector.broadcast %176 : vector<4x1xf32> to vector<4x64xf32>
    %178 = arith.subf %172, %177 : vector<4x64xf32>
    %179 = tpu.concatenate %178, %129, %163 in 1 : vector<4x64xf32>, vector<4x32xf32>, vector<4x32xf32> -> vector<4x128xf32>
    %c0_62 = arith.constant 0 : index
    %c0_63 = arith.constant 0 : index
    %180 = vector.load %arg16[%c0_62, %c0_63] : memref<4x128xf32, #tpu.memory_space<vmem>>, vector<4x128xf32>
    tpu.vector_store %arg16[%c0_62, %c0_63], %179 {strides = array<i32>} : memref<4x128xf32, #tpu.memory_space<vmem>>, vector<4x128xf32>,
    return
  }
}

</mosaic_0001>

<llo_original>
// kernel: decoder_forward.1
$region0: #{decoder_forward.1}
  #allocation0 [shape = 'u32[]', space=smem, size = 0x4, offset = 0x4, fixed_abs, tag = 'smem constant byte address 0x4 - core index']
  #allocation1 [shape = 'u32[144,128]{1,0:T(1,128)}', space=vmem, size = 0x12000, scoped, tag = 'internal scratch']
  %s0 = inlined_call_operand.vmem [shape: s32[4,1], index: 0, kind: input, shape index: {}]
  %s1 = inlined_call_operand.vmem [shape: f32[64,32], index: 1, kind: input, shape index: {}]
  %s2 = inlined_call_operand.vmem [shape: f32[2,4,32], index: 2, kind: input, shape index: {}]
  %s3 = inlined_call_operand.vmem [shape: f32[8,4,32], index: 3, kind: input, shape index: {}]
  %s4 = inlined_call_operand.vmem [shape: f32[32,256], index: 4, kind: input, shape index: {}]
  %s5 = inlined_call_operand.vmem [shape: f32[32,256], index: 5, kind: input, shape index: {}]
  %s6 = inlined_call_operand.vmem [shape: f32[1,256], index: 6, kind: input, shape index: {}]
  %s7 = inlined_call_operand.vmem [shape: f32[256,32], index: 7, kind: input, shape index: {}]
  %s8 = inlined_call_operand.vmem [shape: f32[256,32], index: 8, kind: input, shape index: {}]
  %s9 = inlined_call_operand.vmem [shape: f32[1,32], index: 9, kind: input, shape index: {}]
  %s10 = inlined_call_operand.vmem [shape: f32[96,256], index: 10, kind: input, shape index: {}]
  %s11 = inlined_call_operand.vmem [shape: f32[1,256], index: 11, kind: input, shape index: {}]
  %s12 = inlined_call_operand.vmem [shape: f32[64,256], index: 12, kind: input, shape index: {}]
  %s13 = inlined_call_operand.vmem [shape: f32[1,256], index: 13, kind: input, shape index: {}]
  %s14 = inlined_call_operand.vmem [shape: f32[32,64], index: 14, kind: input, shape index: {}]
  %s15 = inlined_call_operand.vmem [shape: f32[1,64], index: 15, kind: input, shape index: {}]
  %s16 = inlined_call_operand.vmem [shape: f32[4,128], index: 16, kind: output, shape index: {}]
  %s17 = sld [smem:[#allocation0]]
  $region74: #{decoder_forward.1} parent=0
    _
  %s19 = ssub.s32 1, %s17
  %s20 = scalar_select 0, %s19, %s17
  // Predicated region
  $region2: #{decoder_forward.1} parent=0 // pred_check
    _
  $region3: #{decoder_forward.1} parent=0 // pred_check_branch
    %22 = sbr.rel (0) target = $region5
  $region4: #{decoder_forward.1} parent=0 // pred_region
    _
  $region5: #{decoder_forward.1} parent=0 // pred_fallthru
    _
  // Predicated region
  $region6: #{decoder_forward.1} parent=0 // pred_check
    _
  $region7: #{decoder_forward.1} parent=0 // pred_check_branch
    %24 = sbr.rel (0) target = $region9
  $region8: #{decoder_forward.1} parent=0 // pred_region
    _
  $region9: #{decoder_forward.1} parent=0 // pred_fallthru
    _
  // Predicated region
  $region10: #{decoder_forward.1} parent=0 // pred_check
    _
  $region11: #{decoder_forward.1} parent=0 // pred_check_branch
    %26 = sbr.rel (0) target = $region13
  $region12: #{decoder_forward.1} parent=0 // pred_region
    _
  $region13: #{decoder_forward.1} parent=0 // pred_fallthru
    _
  // Predicated region
  $region14: #{decoder_forward.1} parent=0 // pred_check
    _
  $region15: #{decoder_forward.1} parent=0 // pred_check_branch
    %28 = sbr.rel (0) target = $region17
  $region16: #{decoder_forward.1} parent=0 // pred_region
    _
  $region17: #{decoder_forward.1} parent=0 // pred_fallthru
    _
  // Predicated region
  $region18: #{decoder_forward.1} parent=0 // pred_check
    _
  $region19: #{decoder_forward.1} parent=0 // pred_check_branch
    %30 = sbr.rel (0) target = $region21
  $region20: #{decoder_forward.1} parent=0 // pred_region
    _
  $region21: #{decoder_forward.1} parent=0 // pred_fallthru
    _
  // Predicated region
  $region22: #{decoder_forward.1} parent=0 // pred_check
    _
  $region23: #{decoder_forward.1} parent=0 // pred_check_branch
    %32 = sbr.rel (0) target = $region25
  $region24: #{decoder_forward.1} parent=0 // pred_region
    _
  $region25: #{decoder_forward.1} parent=0 // pred_fallthru
    _
  // Predicated region
  $region26: #{decoder_forward.1} parent=0 // pred_check
    _
  $region27: #{decoder_forward.1} parent=0 // pred_check_branch
    %34 = sbr.rel (0) target = $region29
  $region28: #{decoder_forward.1} parent=0 // pred_region
    _
  $region29: #{decoder_forward.1} parent=0 // pred_fallthru
    _
  // Predicated region
  $region30: #{decoder_forward.1} parent=0 // pred_check
    _
  $region31: #{decoder_forward.1} parent=0 // pred_check_branch
    %36 = sbr.rel (0) target = $region33
  $region32: #{decoder_forward.1} parent=0 // pred_region
    _
  $region33: #{decoder_forward.1} parent=0 // pred_fallthru
    _
  // Predicated region
  $region34: #{decoder_forward.1} parent=0 // pred_check
    _
  $region35: #{decoder_forward.1} parent=0 // pred_check_branch
    %38 = sbr.rel (0) target = $region37
  $region36: #{decoder_forward.1} parent=0 // pred_region
    _
  $region37: #{decoder_forward.1} parent=0 // pred_fallthru
    _
  // Predicated region
  $region38: #{decoder_forward.1} parent=0 // pred_check
    _
  $region39: #{decoder_forward.1} parent=0 // pred_check_branch
    %40 = sbr.rel (0) target = $region41
  $region40: #{decoder_forward.1} parent=0 // pred_region
    _
  $region41: #{decoder_forward.1} parent=0 // pred_fallthru
    _
  // Predicated region
  $region42: #{decoder_forward.1} parent=0 // pred_check
    _
  $region43: #{decoder_forward.1} parent=0 // pred_check_branch
    %42 = sbr.rel (0) target = $region45
  $region44: #{decoder_forward.1} parent=0 // pred_region
    _
  $region45: #{decoder_forward.1} parent=0 // pred_fallthru
    _
  // Predicated region
  $region46: #{decoder_forward.1} parent=0 // pred_check
    _
  $region47: #{decoder_forward.1} parent=0 // pred_check_branch
    %44 = sbr.rel (0) target = $region49
  $region48: #{decoder_forward.1} parent=0 // pred_region
    _
  $region49: #{decoder_forward.1} parent=0 // pred_fallthru
    _
  // Predicated region
  $region50: #{decoder_forward.1} parent=0 // pred_check
    _
  $region51: #{decoder_forward.1} parent=0 // pred_check_branch
    %46 = sbr.rel (0) target = $region53
  $region52: #{decoder_forward.1} parent=0 // pred_region
    _
  $region53: #{decoder_forward.1} parent=0 // pred_fallthru
    _
  // Predicated region
  $region54: #{decoder_forward.1} parent=0 // pred_check
    _
  $region55: #{decoder_forward.1} parent=0 // pred_check_branch
    %48 = sbr.rel (0) target = $region57
  $region56: #{decoder_forward.1} parent=0 // pred_region
    _
  $region57: #{decoder_forward.1} parent=0 // pred_fallthru
    _
  // Predicated region
  $region58: #{decoder_forward.1} parent=0 // pred_check
    _
  $region59: #{decoder_forward.1} parent=0 // pred_check_branch
    %50 = sbr.rel (0) target = $region61
  $region60: #{decoder_forward.1} parent=0 // pred_region
    _
  $region61: #{decoder_forward.1} parent=0 // pred_fallthru
    _
  // Predicated region
  $region62: #{decoder_forward.1} parent=0 // pred_check
    _
  $region63: #{decoder_forward.1} parent=0 // pred_check_branch
    %52 = sbr.rel (0) target = $region65
  $region64: #{decoder_forward.1} parent=0 // pred_region
    _
  $region65: #{decoder_forward.1} parent=0 // pred_fallthru
    _
  %v53 = vld [vmem:[%s0] sm:$0xf]
  %v54 = vlaneseq
  %v55 = vand.u32 %v54, 127
  %56 = vset.pattern.permute.xlu0 0
  %57 = vperm.xlu0 %56, %v53
  %v58 = vpop.permute.xlu0 %57
  %vm59 = vcmp.eq.s32.totalorder %v55, %v58
  %v60 = vsel %vm59, 1, 0
  %v61 = vcvt.s32.f32 %v60
  %v62 = vld [vmem:[%s1] sm:$0xff]
  %v63 = vld [vmem:[%s1 + $0x8] sm:$0xff]
  %v64 = vld [vmem:[%s1 + $0x10] sm:$0xff]
  %v65 = vld [vmem:[%s1 + $0x18] sm:$0xff]
  %v66 = vld [vmem:[%s1 + $0x20] sm:$0xff]
  %v67 = vld [vmem:[%s1 + $0x28] sm:$0xff]
  %v68 = vld [vmem:[%s1 + $0x30] sm:$0xff]
  %v69 = vld [vmem:[%s1 + $0x38] sm:$0xff]
  %vm70 = vcmask 523264
  %v72 = vsel %vm70, %v61, 0
  %74 = vmatprep.subr.mxu0 0.0
  %75 = vmatpush1.msra.mxu0 %v62
  %76 = vmatprep.subr.mxu0 0.0
  %77 = vmatpush1.msra.mxu0 %v63
  %78 = vmatprep.subr.mxu0 0.0
  %79 = vmatpush1.msra.mxu0 %v64
  %80 = vmatprep.subr.mxu0 0.0
  %81 = vmatpush1.msra.mxu0 %v65
  %82 = vmatprep.subr.mxu0 0.0
  %83 = vmatpush1.msra.mxu0 %v66
  %84 = vmatprep.subr.mxu0 0.0
  %85 = vmatpush1.msra.mxu0 %v67
  %86 = vmatprep.subr.mxu0 0.0
  %87 = vmatpush1.msra.mxu0 %v68
  %88 = vmatprep.subr.mxu0 0.0
  %89 = vmatpush1.msra.mxu0 %v69
  %90 = vmatprep.subr.mxu0 0.0
  %91 = vmatpush1.msra.mxu0 0.0
  %92 = vmatprep.subr.mxu0 0.0
  %93 = vmatpush1.msra.mxu0 0.0
  %94 = vmatprep.subr.mxu0 0.0
  %95 = vmatpush1.msra.mxu0 0.0
  %96 = vmatprep.subr.mxu0 0.0
  %97 = vmatpush1.msra.mxu0 0.0
  %98 = vmatprep.subr.mxu0 0.0
  %99 = vmatpush1.msra.mxu0 0.0
  %100 = vmatprep.subr.mxu0 0.0
  %101 = vmatpush1.msra.mxu0 0.0
  %102 = vmatprep.subr.mxu0 0.0
  %103 = vmatpush1.msra.mxu0 0.0
  %104 = vmatprep.subr.mxu0 0.0
  %105 = vmatpush1.msra.mxu0 0.0
  %106 = vmatprep.subr.mxu0 0.0
  %107 = vmatpush1.msra.mxu0 0.0
  %108 = vmatprep.subr.mxu0 0.0
  %109 = vmatpush1.msra.mxu0 0.0
  %110 = vmatprep.subr.mxu0 0.0
  %111 = vmatpush1.msra.mxu0 0.0
  %112 = vmatprep.subr.mxu0 0.0
  %113 = vmatpush1.msra.mxu0 0.0
  %114 = vmatprep.subr.mxu0 0.0
  %115 = vmatpush1.msra.mxu0 0.0
  %116 = vmatprep.subr.mxu0 0.0
  %117 = vmatpush1.msra.mxu0 0.0
  %118 = vmatprep.subr.mxu0 0.0
  %119 = vmatpush1.msra.mxu0 0.0
  %120 = vmatprep.subr.mxu0 0.0
  %121 = vmatpush1.msra.mxu0 0.0
  %122 = vmatprep.subr.mxu0 0.0
  %123 = vmatpush1.msra.mxu0 0.0
  %124 = vmatprep.subr.mxu0 0.0
  %125 = vmatpush1.msra.mxu0 0.0
  %126 = vmatprep.subr.mxu0 0.0
  %127 = vmatpush1.msra.mxu0 0.0
  %128 = vmatprep.subr.mxu0 0.0
  %129 = vmatpush1.msra.mxu0 0.0
  %130 = vmatprep.subr.mxu0 0.0
  %131 = vmatpush1.msra.mxu0 0.0
  %132 = vmatprep.subr.mxu0 0.0
  %133 = vmatpush1.msra.mxu0 0.0
  %134 = vmatprep.subr.mxu0 0.0
  %135 = vmatpush1.msra.mxu0 0.0
  %136 = vmatprep.subr.mxu0 0.0
  %137 = vmatpush1.msra.mxu0 0.0
  %138 = vmatprep.mubr.f32.mxu0 0.0
  %139 = vmatmul.mubr.f32.gmra.mrb[0].mxu0 %v72
  %v140 = vpop.f32.mrb[0].mxu0
  %v141 = vadd.f32 0.0, %v140
  %v142 = vpop.f32.mrb[0].mxu0
  %143 = vdwg.mxu0
  %v144 = vld [vmem:[%s2] sm:$0xf]
  %v145 = vld [vmem:[%s2 + $0x4] sm:$0xf]
  %vm146 = vcmask 257024
  %v147 = vsel %vm146, %v144, 0.0
  %v148 = vsel %vm146, %v145, 0.0
  %v149 = vadd.f32 %v147, %v148
  %v150 = vld [vmem:[%s3] sm:$0xf]
  %v151 = vld [vmem:[%s3 + $0x4] sm:$0xf]
  %v152 = vld [vmem:[%s3 + $0x8] sm:$0xf]
  %v153 = vld [vmem:[%s3 + $0xc] sm:$0xf]
  %v154 = vld [vmem:[%s3 + $0x10] sm:$0xf]
  %v155 = vld [vmem:[%s3 + $0x14] sm:$0xf]
  %v156 = vld [vmem:[%s3 + $0x18] sm:$0xf]
  %v157 = vld [vmem:[%s3 + $0x1c] sm:$0xf]
  %v158 = vld [vmem:[%s4] sm:$0xff]
  %v159 = vld [vmem:[%s4 + $0x8] sm:$0xff]
  %v160 = vld [vmem:[%s4 + $0x10] sm:$0xff]
  %v161 = vld [vmem:[%s4 + $0x18] sm:$0xff]
  %v162 = vld [vmem:[%s4 + $0x20] sm:$0xff]
  %v163 = vld [vmem:[%s4 + $0x28] sm:$0xff]
  %v164 = vld [vmem:[%s4 + $0x30] sm:$0xff]
  %v165 = vld [vmem:[%s4 + $0x38] sm:$0xff]
  %vm166 = vcmask 261120
  %v168 = vsel %vm166, %v149, 0
  %170 = vmatprep.subr.mxu0 %v159
  %171 = vmatpush1.msra.mxu0 %v158
  %172 = vmatprep.subr.mxu0 %v161
  %173 = vmatpush1.msra.mxu0 %v160
  %174 = vmatprep.subr.mxu0 %v163
  %175 = vmatpush1.msra.mxu0 %v162
  %176 = vmatprep.subr.mxu0 %v165
  %177 = vmatpush1.msra.mxu0 %v164
  %178 = vmatprep.subr.mxu0 0.0
  %179 = vmatpush1.msra.mxu0 0.0
  %180 = vmatprep.subr.mxu0 0.0
  %181 = vmatpush1.msra.mxu0 0.0
  %182 = vmatprep.subr.mxu0 0.0
  %183 = vmatpush1.msra.mxu0 0.0
  %184 = vmatprep.subr.mxu0 0.0
  %185 = vmatpush1.msra.mxu0 0.0
  %186 = vmatprep.subr.mxu0 0.0
  %187 = vmatpush1.msra.mxu0 0.0
  %188 = vmatprep.subr.mxu0 0.0
  %189 = vmatpush1.msra.mxu0 0.0
  %190 = vmatprep.subr.mxu0 0.0
  %191 = vmatpush1.msra.mxu0 0.0
  %192 = vmatprep.subr.mxu0 0.0
  %193 = vmatpush1.msra.mxu0 0.0
  %194 = vmatprep.subr.mxu0 0.0
  %195 = vmatpush1.msra.mxu0 0.0
  %196 = vmatprep.subr.mxu0 0.0
  %197 = vmatpush1.msra.mxu0 0.0
  %198 = vmatprep.subr.mxu0 0.0
  %199 = vmatpush1.msra.mxu0 0.0
  %200 = vmatprep.subr.mxu0 0.0
  %201 = vmatpush1.msra.mxu0 0.0
  %202 = vmatprep.subr.mxu0 0.0
  %203 = vmatpush1.msra.mxu0 0.0
  %204 = vmatprep.subr.mxu0 0.0
  %205 = vmatpush1.msra.mxu0 0.0
  %206 = vmatprep.subr.mxu0 0.0
  %207 = vmatpush1.msra.mxu0 0.0
  %208 = vmatprep.subr.mxu0 0.0
  %209 = vmatpush1.msra.mxu0 0.0
  %210 = vmatprep.subr.mxu0 0.0
  %211 = vmatpush1.msra.mxu0 0.0
  %212 = vmatprep.subr.mxu0 0.0
  %213 = vmatpush1.msra.mxu0 0.0
  %214 = vmatprep.subr.mxu0 0.0
  %215 = vmatpush1.msra.mxu0 0.0
  %216 = vmatprep.subr.mxu0 0.0
  %217 = vmatpush1.msra.mxu0 0.0
  %218 = vmatprep.subr.mxu0 0.0
  %219 = vmatpush1.msra.mxu0 0.0
  %220 = vmatprep.subr.mxu0 0.0
  %221 = vmatpush1.msra.mxu0 0.0
  %222 = vmatprep.subr.mxu0 0.0
  %223 = vmatpush1.msra.mxu0 0.0
  %224 = vmatprep.subr.mxu0 0.0
  %225 = vmatpush1.msra.mxu0 0.0
  %226 = vmatprep.subr.mxu0 0.0
  %227 = vmatpush1.msra.mxu0 0.0
  %228 = vmatprep.subr.mxu0 0.0
  %229 = vmatpush1.msra.mxu0 0.0
  %230 = vmatprep.subr.mxu0 0.0
  %231 = vmatpush1.msra.mxu0 0.0
  %232 = vmatprep.subr.mxu0 0.0
  %233 = vmatpush1.msra.mxu0 0.0
  %234 = vmatprep.mubr.f32.mxu0 0.0
  %235 = vmatmul.mubr.f32.gmra.mrb[0].mxu0 %v168
  %v236 = vpop.f32.mrb[0].mxu0
  %v237 = vadd.f32 0.0, %v236
  %v238 = vpop.f32.mrb[0].mxu0
  %v239 = vadd.f32 0.0, %v238
  %240 = vdwg.mxu0
  %v241 = vld [vmem:[%s5] sm:$0xff]
  %v242 = vld [vmem:[%s5 + $0x8] sm:$0xff]
  %v243 = vld [vmem:[%s5 + $0x10] sm:$0xff]
  %v244 = vld [vmem:[%s5 + $0x18] sm:$0xff]
  %v245 = vld [vmem:[%s5 + $0x20] sm:$0xff]
  %v246 = vld [vmem:[%s5 + $0x28] sm:$0xff]
  %v247 = vld [vmem:[%s5 + $0x30] sm:$0xff]
  %v248 = vld [vmem:[%s5 + $0x38] sm:$0xff]
  %v257 = vcombine.low %v150, %v151
  %v258 = vcombine.low %v152, %v153
  %v259 = vcombine.low %v154, %v155
  %v260 = vcombine.low %v156, %v157
  %v261 = vsel %vm166, %v257, 0
  %v263 = vsel %vm166, %v258, 0
  %v265 = vsel %vm166, %v259, 0
  %v267 = vsel %vm166, %v260, 0
  %269 = vmatprep.subr.mxu0 %v242
  %270 = vmatpush1.msra.mxu0 %v241
  %271 = vmatprep.subr.mxu0 %v244
  %272 = vmatpush1.msra.mxu0 %v243
  %273 = vmatprep.subr.mxu0 %v246
  %274 = vmatpush1.msra.mxu0 %v245
  %275 = vmatprep.subr.mxu0 %v248
  %276 = vmatpush1.msra.mxu0 %v247
  %277 = vmatprep.subr.mxu0 0.0
  %278 = vmatpush1.msra.mxu0 0.0
  %279 = vmatprep.subr.mxu0 0.0
  %280 = vmatpush1.msra.mxu0 0.0
  %281 = vmatprep.subr.mxu0 0.0
  %282 = vmatpush1.msra.mxu0 0.0
  %283 = vmatprep.subr.mxu0 0.0
  %284 = vmatpush1.msra.mxu0 0.0
  %285 = vmatprep.subr.mxu0 0.0
  %286 = vmatpush1.msra.mxu0 0.0
  %287 = vmatprep.subr.mxu0 0.0
  %288 = vmatpush1.msra.mxu0 0.0
  %289 = vmatprep.subr.mxu0 0.0
  %290 = vmatpush1.msra.mxu0 0.0
  %291 = vmatprep.subr.mxu0 0.0
  %292 = vmatpush1.msra.mxu0 0.0
  %293 = vmatprep.subr.mxu0 0.0
  %294 = vmatpush1.msra.mxu0 0.0
  %295 = vmatprep.subr.mxu0 0.0
  %296 = vmatpush1.msra.mxu0 0.0
  %297 = vmatprep.subr.mxu0 0.0
  %298 = vmatpush1.msra.mxu0 0.0
  %299 = vmatprep.subr.mxu0 0.0
  %300 = vmatpush1.msra.mxu0 0.0
  %301 = vmatprep.subr.mxu0 0.0
  %302 = vmatpush1.msra.mxu0 0.0
  %303 = vmatprep.subr.mxu0 0.0
  %304 = vmatpush1.msra.mxu0 0.0
  %305 = vmatprep.subr.mxu0 0.0
  %306 = vmatpush1.msra.mxu0 0.0
  %307 = vmatprep.subr.mxu0 0.0
  %308 = vmatpush1.msra.mxu0 0.0
  %309 = vmatprep.subr.mxu0 0.0
  %310 = vmatpush1.msra.mxu0 0.0
  %311 = vmatprep.subr.mxu0 0.0
  %312 = vmatpush1.msra.mxu0 0.0
  %313 = vmatprep.subr.mxu0 0.0
  %314 = vmatpush1.msra.mxu0 0.0
  %315 = vmatprep.subr.mxu0 0.0
  %316 = vmatpush1.msra.mxu0 0.0
  %317 = vmatprep.subr.mxu0 0.0
  %318 = vmatpush1.msra.mxu0 0.0
  %319 = vmatprep.subr.mxu0 0.0
  %320 = vmatpush1.msra.mxu0 0.0
  %321 = vmatprep.subr.mxu0 0.0
  %322 = vmatpush1.msra.mxu0 0.0
  %323 = vmatprep.subr.mxu0 0.0
  %324 = vmatpush1.msra.mxu0 0.0
  %325 = vmatprep.subr.mxu0 0.0
  %326 = vmatpush1.msra.mxu0 0.0
  %327 = vmatprep.subr.mxu0 0.0
  %328 = vmatpush1.msra.mxu0 0.0
  %329 = vmatprep.subr.mxu0 0.0
  %330 = vmatpush1.msra.mxu0 0.0
  %331 = vmatprep.subr.mxu0 0.0
  %332 = vmatpush1.msra.mxu0 0.0
  %333 = vmatprep.mubr.f32.mxu0 0.0
  %334 = vmatmul.mubr.f32.gmra.mrb[0].mxu0 %v261
  %v335 = vpop.f32.mrb[0].mxu0
  %v336 = vadd.f32 0.0, %v335
  %v337 = vpop.f32.mrb[0].mxu0
  %v338 = vadd.f32 0.0, %v337
  %339 = vmatprep.mubr.f32.mxu0 0.0
  %340 = vmatmul.mubr.f32.gmra.mrb[0].mxu0 %v263
  %v341 = vpop.f32.mrb[0].mxu0
  %v342 = vadd.f32 0.0, %v341
  %v343 = vpop.f32.mrb[0].mxu0
  %v344 = vadd.f32 0.0, %v343
  %345 = vmatprep.mubr.f32.mxu0 0.0
  %346 = vmatmul.mubr.f32.gmra.mrb[0].mxu0 %v265
  %v347 = vpop.f32.mrb[0].mxu0
  %v348 = vadd.f32 0.0, %v347
  %v349 = vpop.f32.mrb[0].mxu0
  %v350 = vadd.f32 0.0, %v349
  %351 = vmatprep.mubr.f32.mxu0 0.0
  %352 = vmatmul.mubr.f32.gmra.mrb[0].mxu0 %v267
  %v353 = vpop.f32.mrb[0].mxu0
  %v354 = vadd.f32 0.0, %v353
  %v355 = vpop.f32.mrb[0].mxu0
  %v356 = vadd.f32 0.0, %v355
  %357 = vdwg.mxu0
  %v366 = vcombine.low %v336, %v338
  %v367 = vcombine.high %v336, %v338
  %v368 = vcombine.low %v342, %v344
  %v369 = vcombine.high %v342, %v344
  %v370 = vcombine.low %v348, %v350
  %v371 = vcombine.high %v348, %v350
  %v372 = vcombine.low %v354, %v356
  %v373 = vcombine.high %v354, %v356
  %v384 = vcombine.low %v237, %v239
  %v386 = vadd.f32 %v366, %v384
  %v387 = vadd.f32 %v367, %v384
  %v388 = vadd.f32 %v368, %v384
  %v389 = vadd.f32 %v369, %v384
  %v390 = vadd.f32 %v370, %v384
  %v391 = vadd.f32 %v371, %v384
  %v392 = vadd.f32 %v372, %v384
  %v393 = vadd.f32 %v373, %v384
  %v394 = vld [vmem:[%s6] sm:$0x3]
  %v396 = vlaneseq
  %v397 = vshrl.u32 %v396, 7
  %v398 = vsub.s32 0, %v397
  %v399 = vrot.slane %v394, %v398
  %v400 = vlaneseq
  %v401 = vshrl.u32 %v400, 7
  %v402 = vsub.s32 1, %v401
  %v403 = vrot.slane %v394, %v402
  %v404 = vcombine.low %v399, %v403
  %v406 = vadd.f32 %v386, %v404
  %v407 = vadd.f32 %v387, %v404
  %v408 = vadd.f32 %v388, %v404
  %v409 = vadd.f32 %v389, %v404
  %v410 = vadd.f32 %v390, %v404
  %v411 = vadd.f32 %v391, %v404
  %v412 = vadd.f32 %v392, %v404
  %v413 = vadd.f32 %v393, %v404
  %v414 = vtanh.pop %v406
  %v415 = vtanh.pop %v407
  %v416 = vtanh.pop %v408
  %v417 = vtanh.pop %v409
  %v418 = vtanh.pop %v410
  %v419 = vtanh.pop %v411
  %v420 = vtanh.pop %v412
  %v421 = vtanh.pop %v413
  %v422 = vld [vmem:[%s7] sm:$0xff]
  %v423 = vld [vmem:[%s7 + $0x8] sm:$0xff]
  %v424 = vld [vmem:[%s7 + $0x10] sm:$0xff]
  %v425 = vld [vmem:[%s7 + $0x18] sm:$0xff]
  %v426 = vld [vmem:[%s7 + $0x20] sm:$0xff]
  %v427 = vld [vmem:[%s7 + $0x28] sm:$0xff]
  %v428 = vld [vmem:[%s7 + $0x30] sm:$0xff]
  %v429 = vld [vmem:[%s7 + $0x38] sm:$0xff]
  %v430 = vld [vmem:[%s7 + $0x40] sm:$0xff]
  %v431 = vld [vmem:[%s7 + $0x48] sm:$0xff]
  %v432 = vld [vmem:[%s7 + $0x50] sm:$0xff]
  %v433 = vld [vmem:[%s7 + $0x58] sm:$0xff]
  %v434 = vld [vmem:[%s7 + $0x60] sm:$0xff]
  %v435 = vld [vmem:[%s7 + $0x68] sm:$0xff]
  %v436 = vld [vmem:[%s7 + $0x70] sm:$0xff]
  %v437 = vld [vmem:[%s7 + $0x78] sm:$0xff]
  %v438 = vld [vmem:[%s7 + $0x80] sm:$0xff]
  %v439 = vld [vmem:[%s7 + $0x88] sm:$0xff]
  %v440 = vld [vmem:[%s7 + $0x90] sm:$0xff]
  %v441 = vld [vmem:[%s7 + $0x98] sm:$0xff]
  %v442 = vld [vmem:[%s7 + $0xa0] sm:$0xff]
  %v443 = vld [vmem:[%s7 + $0xa8] sm:$0xff]
  %v444 = vld [vmem:[%s7 + $0xb0] sm:$0xff]
  %v445 = vld [vmem:[%s7 + $0xb8] sm:$0xff]
  %v446 = vld [vmem:[%s7 + $0xc0] sm:$0xff]
  %v447 = vld [vmem:[%s7 + $0xc8] sm:$0xff]
  %v448 = vld [vmem:[%s7 + $0xd0] sm:$0xff]
  %v449 = vld [vmem:[%s7 + $0xd8] sm:$0xff]
  %v450 = vld [vmem:[%s7 + $0xe0] sm:$0xff]
  %v451 = vld [vmem:[%s7 + $0xe8] sm:$0xff]
  %v452 = vld [vmem:[%s7 + $0xf0] sm:$0xff]
  %v453 = vld [vmem:[%s7 + $0xf8] sm:$0xff]
  %v462 = vcombine.low %v414, %v415
  %v463 = vcombine.high %v414, %v415
  %v464 = vcombine.low %v416, %v417
  %v465 = vcombine.high %v416, %v417
  %v466 = vcombine.low %v418, %v419
  %v467 = vcombine.high %v418, %v419
  %v468 = vcombine.low %v420, %v421
  %v469 = vcombine.high %v420, %v421
  %478 = vmatprep.subr.mxu0 0.0
  %479 = vmatpush1.msra.mxu0 %v422
  %480 = vmatprep.subr.mxu0 0.0
  %481 = vmatpush1.msra.mxu0 %v423
  %482 = vmatprep.subr.mxu0 0.0
  %483 = vmatpush1.msra.mxu0 %v424
  %484 = vmatprep.subr.mxu0 0.0
  %485 = vmatpush1.msra.mxu0 %v425
  %486 = vmatprep.subr.mxu0 0.0
  %487 = vmatpush1.msra.mxu0 %v426
  %488 = vmatprep.subr.mxu0 0.0
  %489 = vmatpush1.msra.mxu0 %v427
  %490 = vmatprep.subr.mxu0 0.0
  %491 = vmatpush1.msra.mxu0 %v428
  %492 = vmatprep.subr.mxu0 0.0
  %493 = vmatpush1.msra.mxu0 %v429
  %494 = vmatprep.subr.mxu0 0.0
  %495 = vmatpush1.msra.mxu0 %v430
  %496 = vmatprep.subr.mxu0 0.0
  %497 = vmatpush1.msra.mxu0 %v431
  %498 = vmatprep.subr.mxu0 0.0
  %499 = vmatpush1.msra.mxu0 %v432
  %500 = vmatprep.subr.mxu0 0.0
  %501 = vmatpush1.msra.mxu0 %v433
  %502 = vmatprep.subr.mxu0 0.0
  %503 = vmatpush1.msra.mxu0 %v434
  %504 = vmatprep.subr.mxu0 0.0
  %505 = vmatpush1.msra.mxu0 %v435
  %506 = vmatprep.subr.mxu0 0.0
  %507 = vmatpush1.msra.mxu0 %v436
  %508 = vmatprep.subr.mxu0 0.0
  %509 = vmatpush1.msra.mxu0 %v437
  %510 = vmatprep.subr.mxu0 0.0
  %511 = vmatpush1.msra.mxu0 %v438
  %512 = vmatprep.subr.mxu0 0.0
  %513 = vmatpush1.msra.mxu0 %v439
  %514 = vmatprep.subr.mxu0 0.0
  %515 = vmatpush1.msra.mxu0 %v440
  %516 = vmatprep.subr.mxu0 0.0
  %517 = vmatpush1.msra.mxu0 %v441
  %518 = vmatprep.subr.mxu0 0.0
  %519 = vmatpush1.msra.mxu0 %v442
  %520 = vmatprep.subr.mxu0 0.0
  %521 = vmatpush1.msra.mxu0 %v443
  %522 = vmatprep.subr.mxu0 0.0
  %523 = vmatpush1.msra.mxu0 %v444
  %524 = vmatprep.subr.mxu0 0.0
  %525 = vmatpush1.msra.mxu0 %v445
  %526 = vmatprep.subr.mxu0 0.0
  %527 = vmatpush1.msra.mxu0 %v446
  %528 = vmatprep.subr.mxu0 0.0
  %529 = vmatpush1.msra.mxu0 %v447
  %530 = vmatprep.subr.mxu0 0.0
  %531 = vmatpush1.msra.mxu0 %v448
  %532 = vmatprep.subr.mxu0 0.0
  %533 = vmatpush1.msra.mxu0 %v449
  %534 = vmatprep.subr.mxu0 0.0
  %535 = vmatpush1.msra.mxu0 %v450
  %536 = vmatprep.subr.mxu0 0.0
  %537 = vmatpush1.msra.mxu0 %v451
  %538 = vmatprep.subr.mxu0 0.0
  %539 = vmatpush1.msra.mxu0 %v452
  %540 = vmatprep.subr.mxu0 0.0
  %541 = vmatpush1.msra.mxu0 %v453
  %542 = vmatprep.mubr.f32.mxu0 %v463
  %543 = vmatmul.mubr.f32.gmra.mrb[0].mxu0 %v462
  %v544 = vpop.f32.mrb[0].mxu0
  %v545 = vadd.f32 0.0, %v544
  %v546 = vpop.f32.mrb[0].mxu0
  %547 = vmatprep.mubr.f32.mxu0 %v465
  %548 = vmatmul.mubr.f32.gmra.mrb[0].mxu0 %v464
  %v549 = vpop.f32.mrb[0].mxu0
  %v550 = vadd.f32 0.0, %v549
  %v551 = vpop.f32.mrb[0].mxu0
  %552 = vmatprep.mubr.f32.mxu0 %v467
  %553 = vmatmul.mubr.f32.gmra.mrb[0].mxu0 %v466
  %v554 = vpop.f32.mrb[0].mxu0
  %v555 = vadd.f32 0.0, %v554
  %v556 = vpop.f32.mrb[0].mxu0
  %557 = vmatprep.mubr.f32.mxu0 %v469
  %558 = vmatmul.mubr.f32.gmra.mrb[0].mxu0 %v468
  %v559 = vpop.f32.mrb[0].mxu0
  %v560 = vadd.f32 0.0, %v559
  %v561 = vpop.f32.mrb[0].mxu0
  %562 = vdwg.mxu0
  %v563 = vlaneseq
  %v564 = vshrl.u32 %v563, 7
  %v565 = vadd.s32 %v564, 8
  %v566 = vadd.s32 %v564, 16
  %v567 = vadd.s32 %v564, 24
  %vm568 = vcmp.lt.s32.totalorder %v564, 0
  %v569 = vsub.s32 0, %v564
  %v570 = vsel %vm568, %v569, %v564
  %v571 = vshrl.u32 %v570, 2
  %v572 = vand.u32 %v570, 3
  %v573 = vsub.s32 0, %v572
  %v574 = vsel %vm568, %v573, %v572
  %vm575 = vcmp.lt.s32.totalorder %v565, 0
  %v576 = vsub.s32 0, %v565
  %v577 = vsel %vm575, %v576, %v565
  %v578 = vshrl.u32 %v577, 2
  %v579 = vand.u32 %v577, 3
  %v580 = vsub.s32 0, %v579
  %v581 = vsel %vm575, %v580, %v579
  %vm582 = vcmp.lt.s32.totalorder %v566, 0
  %v583 = vsub.s32 0, %v566
  %v584 = vsel %vm582, %v583, %v566
  %v585 = vshrl.u32 %v584, 2
  %v586 = vand.u32 %v584, 3
  %v587 = vsub.s32 0, %v586
  %v588 = vsel %vm582, %v587, %v586
  %vm589 = vcmp.lt.s32.totalorder %v567, 0
  %v590 = vsub.s32 0, %v567
  %v591 = vsel %vm589, %v590, %v567
  %v592 = vshrl.u32 %v591, 2
  %v593 = vand.u32 %v591, 3
  %v594 = vsub.s32 0, %v593
  %v595 = vsel %vm589, %v594, %v593
  %vm596 = vcmp.ne.s32.totalorder %v574, 0
  %vm597 = vcmp.ne.s32.totalorder %v581, 0
  %vm598 = vcmp.ne.s32.totalorder %v588, 0
  %vm599 = vcmp.ne.s32.totalorder %v595, 0
  %vm600 = vcmp.lt.s32.totalorder %v574, 0
  %vm601 = vcmp.lt.s32.totalorder %v581, 0
  %vm602 = vcmp.lt.s32.totalorder %v588, 0
  %vm603 = vcmp.lt.s32.totalorder %v595, 0
  %vm604 = vmand %vm600, %vm596
  %vm605 = vmand %vm601, %vm597
  %vm606 = vmand %vm602, %vm598
  %vm607 = vmand %vm603, %vm599
  %v608 = vadd.s32 %v574, 4
  %v609 = vadd.s32 %v581, 4
  %v610 = vadd.s32 %v588, 4
  %v611 = vadd.s32 %v595, 4
  %v612 = vsel %vm604, %v608, %v574
  %v613 = vsel %vm605, %v609, %v581
  %v614 = vsel %vm606, %v610, %v588
  %v615 = vsel %vm607, %v611, %v595
  %vm616 = vcmp.lt.s32.totalorder %v55, 0
  %v617 = vsub.s32 0, %v55
  %v618 = vsel %vm616, %v617, %v55
  %v619 = vshrl.u32 %v618, 2
  %v620 = vand.u32 %v618, 3
  %v621 = vsub.s32 0, %v620
  %v622 = vsel %vm616, %v621, %v620
  %vm623 = vcmp.ne.s32.totalorder %v622, 0
  %vm624 = vcmp.lt.s32.totalorder %v622, 0
  %vm625 = vmand %vm624, %vm623
  %v626 = vadd.s32 %v622, 4
  %v627 = vsel %vm625, %v626, %v622
  %vm628 = vcmp.eq.s32.totalorder %v612, %v627
  %vm629 = vcmp.eq.s32.totalorder %v613, %v627
  %vm630 = vcmp.eq.s32.totalorder %v614, %v627
  %vm631 = vcmp.eq.s32.totalorder %v615, %v627
  %v632 = vsel %vm628, %v545, -1e+30
  %v633 = vsel %vm629, %v550, -1e+30
  %v634 = vsel %vm630, %v555, -1e+30
  %v635 = vsel %vm631, %v560, -1e+30
  %v636 = vsel %vm166, %v632, -inf
  %v637 = vsel %vm166, %v633, -inf
  %v638 = vsel %vm166, %v634, -inf
  %v639 = vsel %vm166, %v635, -inf
  %v640 = vmax.f32 %v636, %v637
  %v641 = vmax.f32 %v638, %v639
  %v642 = vmax.f32 %v640, %v641
  %v643 = vrot.slane %v642, 4
  %v644 = vmax.f32 %v642, %v643
  %v645 = vrot.slane %v644, 2
  %v646 = vmax.f32 %v644, %v645
  %v647 = vrot.slane %v646, 1
  %v648 = vmax.f32 %v646, %v647
  %v649 = vsub.f32 %v632, %v648
  %v650 = vsub.f32 %v633, %v648
  %v651 = vsub.f32 %v634, %v648
  %v652 = vsub.f32 %v635, %v648
  %v653 = vmul.f32 %v649, 1.442695
  %v654 = vpow.pop %v653
  %v655 = vmul.f32 %v650, 1.442695
  %v656 = vpow.pop %v655
  %v657 = vmul.f32 %v651, 1.442695
  %v658 = vpow.pop %v657
  %v659 = vmul.f32 %v652, 1.442695
  %v660 = vpow.pop %v659
  %v661 = vsel %vm166, %v654, 0.0
  %v662 = vsel %vm166, %v656, 0.0
  %v663 = vadd.f32 %v661, %v662
  %v664 = vsel %vm166, %v658, 0.0
  %v665 = vadd.f32 %v663, %v664
  %v666 = vsel %vm166, %v660, 0.0
  %v667 = vadd.f32 %v665, %v666
  %v668 = vrot.slane %v667, 4
  %v669 = vadd.f32 %v667, %v668
  %v670 = vrot.slane %v669, 2
  %v671 = vadd.f32 %v669, %v670
  %v672 = vrot.slane %v671, 1
  %v673 = vadd.f32 %v671, %v672
  %v674 = vrcp.pop %v673
  %v675 = vmul.f32 %v654, %v674
  %v676 = vmul.f32 %v656, %v674
  %v677 = vmul.f32 %v658, %v674
  %v678 = vmul.f32 %v660, %v674
  %679 = vxpose.xlu0.b32.start [1/16] %v675, 128
  %680 = vxpose.xlu0.b32.cont [2/16] %v676, 128
  %681 = vxpose.xlu0.b32.cont [3/16] %v677, 128
  %682 = vxpose.xlu0.b32.cont [4/16] %v678, 128
  %683 = vxpose.xlu0.b32.cont [5/16] 0.0, 128
  %684 = vxpose.xlu0.b32.cont [6/16] 0.0, 128
  %685 = vxpose.xlu0.b32.cont [7/16] 0.0, 128
  %686 = vxpose.xlu0.b32.cont [8/16] 0.0, 128
  %687 = vxpose.xlu0.b32.cont [9/16] 0.0, 128
  %688 = vxpose.xlu0.b32.cont [10/16] 0.0, 128
  %689 = vxpose.xlu0.b32.cont [11/16] 0.0, 128
  %690 = vxpose.xlu0.b32.cont [12/16] 0.0, 128
  %691 = vxpose.xlu0.b32.cont [13/16] 0.0, 128
  %692 = vxpose.xlu0.b32.cont [14/16] 0.0, 128
  %693 = vxpose.xlu0.b32.cont [15/16] 0.0, 128
  %694 = vxpose.xlu0.b32.end [16/16] 0.0, 128
  %v695 = vpop.trf.xlu0
  %v696 = vpop.trf.xlu0
  %v697 = vpop.trf.xlu0
  %v698 = vpop.trf.xlu0
  %v699 = vpop.trf.xlu0
  %v700 = vpop.trf.xlu0
  %v701 = vpop.trf.xlu0
  %v702 = vpop.trf.xlu0
  %v703 = vpop.trf.xlu0
  %v704 = vpop.trf.xlu0
  %v705 = vpop.trf.xlu0
  %v706 = vpop.trf.xlu0
  %v707 = vpop.trf.xlu0
  %v708 = vpop.trf.xlu0
  %v709 = vpop.trf.xlu0
  %v710 = vpop.trf.xlu0
  %v716 = vsel %vm166, %v695, 0
  %v719 = vsel %vm166, %v696, 0
  %v722 = vsel %vm166, %v697, 0
  %v725 = vsel %vm166, %v698, 0
  %727 = vmatprep.subr.mxu0 0.0
  %728 = vmatpush1.msra.mxu0 %v257
  %729 = vmatprep.subr.mxu0 0.0
  %730 = vmatpush1.msra.mxu0 %v258
  %731 = vmatprep.subr.mxu0 0.0
  %732 = vmatpush1.msra.mxu0 %v259
  %733 = vmatprep.subr.mxu0 0.0
  %734 = vmatpush1.msra.mxu0 %v260
  %735 = vmatprep.subr.mxu0 0.0
  %736 = vmatpush1.msra.mxu0 0.0
  %737 = vmatprep.subr.mxu0 0.0
  %738 = vmatpush1.msra.mxu0 0.0
  %739 = vmatprep.subr.mxu0 0.0
  %740 = vmatpush1.msra.mxu0 0.0
  %741 = vmatprep.subr.mxu0 0.0
  %742 = vmatpush1.msra.mxu0 0.0
  %743 = vmatprep.subr.mxu0 0.0
  %744 = vmatpush1.msra.mxu0 0.0
  %745 = vmatprep.subr.mxu0 0.0
  %746 = vmatpush1.msra.mxu0 0.0
  %747 = vmatprep.subr.mxu0 0.0
  %748 = vmatpush1.msra.mxu0 0.0
  %749 = vmatprep.subr.mxu0 0.0
  %750 = vmatpush1.msra.mxu0 0.0
  %751 = vmatprep.subr.mxu0 0.0
  %752 = vmatpush1.msra.mxu0 0.0
  %753 = vmatprep.subr.mxu0 0.0
  %754 = vmatpush1.msra.mxu0 0.0
  %755 = vmatprep.subr.mxu0 0.0
  %756 = vmatpush1.msra.mxu0 0.0
  %757 = vmatprep.subr.mxu0 0.0
  %758 = vmatpush1.msra.mxu0 0.0
  %759 = vmatprep.subr.mxu0 0.0
  %760 = vmatpush1.msra.mxu0 0.0
  %761 = vmatprep.subr.mxu0 0.0
  %762 = vmatpush1.msra.mxu0 0.0
  %763 = vmatprep.subr.mxu0 0.0
  %764 = vmatpush1.msra.mxu0 0.0
  %765 = vmatprep.subr.mxu0 0.0
  %766 = vmatpush1.msra.mxu0 0.0
  %767 = vmatprep.subr.mxu0 0.0
  %768 = vmatpush1.msra.mxu0 0.0
  %769 = vmatprep.subr.mxu0 0.0
  %770 = vmatpush1.msra.mxu0 0.0
  %771 = vmatprep.subr.mxu0 0.0
  %772 = vmatpush1.msra.mxu0 0.0
  %773 = vmatprep.subr.mxu0 0.0
  %774 = vmatpush1.msra.mxu0 0.0
  %775 = vmatprep.subr.mxu0 0.0
  %776 = vmatpush1.msra.mxu0 0.0
  %777 = vmatprep.subr.mxu0 0.0
  %778 = vmatpush1.msra.mxu0 0.0
  %779 = vmatprep.subr.mxu0 0.0
  %780 = vmatpush1.msra.mxu0 0.0
  %781 = vmatprep.subr.mxu0 0.0
  %782 = vmatpush1.msra.mxu0 0.0
  %783 = vmatprep.subr.mxu0 0.0
  %784 = vmatpush1.msra.mxu0 0.0
  %785 = vmatprep.subr.mxu0 0.0
  %786 = vmatpush1.msra.mxu0 0.0
  %787 = vmatprep.subr.mxu0 0.0
  %788 = vmatpush1.msra.mxu0 0.0
  %789 = vmatprep.subr.mxu0 0.0
  %790 = vmatpush1.msra.mxu0 0.0
  %791 = vmatprep.mubr.f32.mxu0 0.0
  %792 = vmatmul.mubr.f32.gmra.mrb[0].mxu0 %v716
  %v793 = vpop.f32.mrb[0].mxu0
  %v794 = vadd.f32 0.0, %v793
  %v795 = vpop.f32.mrb[0].mxu0
  %796 = vmatprep.mubr.f32.mxu0 0.0
  %797 = vmatmul.mubr.f32.gmra.mrb[0].mxu0 %v719
  %v798 = vpop.f32.mrb[0].mxu0
  %v799 = vadd.f32 0.0, %v798
  %v800 = vpop.f32.mrb[0].mxu0
  %801 = vmatprep.mubr.f32.mxu0 0.0
  %802 = vmatmul.mubr.f32.gmra.mrb[0].mxu0 %v722
  %v803 = vpop.f32.mrb[0].mxu0
  %v804 = vadd.f32 0.0, %v803
  %v805 = vpop.f32.mrb[0].mxu0
  %806 = vmatprep.mubr.f32.mxu0 0.0
  %807 = vmatmul.mubr.f32.gmra.mrb[0].mxu0 %v725
  %v808 = vpop.f32.mrb[0].mxu0
  %v809 = vadd.f32 0.0, %v808
  %v810 = vpop.f32.mrb[0].mxu0
  %811 = vdwg.mxu0
  %v813 = vrot.slane %v794, 4
  %814 = vrot.lane.b32.xlu0 %v813, 32
  %v815 = vpop.permute.xlu0 %814
  %818 = vrot.lane.b32.xlu0 %v799, 64
  %v819 = vpop.permute.xlu0 %818
  %v821 = vrot.slane %v799, 4
  %822 = vrot.lane.b32.xlu0 %v821, 96
  %v823 = vpop.permute.xlu0 %822
  %v826 = vrot.slane %v804, 4
  %827 = vrot.lane.b32.xlu0 %v826, 32
  %v828 = vpop.permute.xlu0 %827
  %831 = vrot.lane.b32.xlu0 %v809, 64
  %v832 = vpop.permute.xlu0 %831
  %v834 = vrot.slane %v809, 4
  %835 = vrot.lane.b32.xlu0 %v834, 96
  %v836 = vpop.permute.xlu0 %835
  %v838 = vsel %vm166, %v794, %v815
  %v839 = vsel %vm70, %v838, %v819
  %vm840 = vcmask 785408
  %v841 = vsel %vm840, %v839, %v823
  %v842 = vsel %vm166, %v804, %v828
  %v843 = vsel %vm70, %v842, %v832
  %v844 = vsel %vm840, %v843, %v836
  %v845 = vld [vmem:[%s8] sm:$0xff]
  %v846 = vld [vmem:[%s8 + $0x8] sm:$0xff]
  %v847 = vld [vmem:[%s8 + $0x10] sm:$0xff]
  %v848 = vld [vmem:[%s8 + $0x18] sm:$0xff]
  %v849 = vld [vmem:[%s8 + $0x20] sm:$0xff]
  %v850 = vld [vmem:[%s8 + $0x28] sm:$0xff]
  %v851 = vld [vmem:[%s8 + $0x30] sm:$0xff]
  %v852 = vld [vmem:[%s8 + $0x38] sm:$0xff]
  %v853 = vld [vmem:[%s8 + $0x40] sm:$0xff]
  %v854 = vld [vmem:[%s8 + $0x48] sm:$0xff]
  %v855 = vld [vmem:[%s8 + $0x50] sm:$0xff]
  %v856 = vld [vmem:[%s8 + $0x58] sm:$0xff]
  %v857 = vld [vmem:[%s8 + $0x60] sm:$0xff]
  %v858 = vld [vmem:[%s8 + $0x68] sm:$0xff]
  %v859 = vld [vmem:[%s8 + $0x70] sm:$0xff]
  %v860 = vld [vmem:[%s8 + $0x78] sm:$0xff]
  %v861 = vld [vmem:[%s8 + $0x80] sm:$0xff]
  %v862 = vld [vmem:[%s8 + $0x88] sm:$0xff]
  %v863 = vld [vmem:[%s8 + $0x90] sm:$0xff]
  %v864 = vld [vmem:[%s8 + $0x98] sm:$0xff]
  %v865 = vld [vmem:[%s8 + $0xa0] sm:$0xff]
  %v866 = vld [vmem:[%s8 + $0xa8] sm:$0xff]
  %v867 = vld [vmem:[%s8 + $0xb0] sm:$0xff]
  %v868 = vld [vmem:[%s8 + $0xb8] sm:$0xff]
  %v869 = vld [vmem:[%s8 + $0xc0] sm:$0xff]
  %v870 = vld [vmem:[%s8 + $0xc8] sm:$0xff]
  %v871 = vld [vmem:[%s8 + $0xd0] sm:$0xff]
  %v872 = vld [vmem:[%s8 + $0xd8] sm:$0xff]
  %v873 = vld [vmem:[%s8 + $0xe0] sm:$0xff]
  %v874 = vld [vmem:[%s8 + $0xe8] sm:$0xff]
  %v875 = vld [vmem:[%s8 + $0xf0] sm:$0xff]
  %v876 = vld [vmem:[%s8 + $0xf8] sm:$0xff]
  %v877 = vld [vmem:[%s9] sm:$0x1]
  %v879 = vlaneseq
  %v880 = vshrl.u32 %v879, 7
  %v881 = vsub.s32 0, %v880
  %v882 = vrot.slane %v877, %v881
  %884 = vmatprep.subr.mxu0 0.0
  %885 = vmatpush1.msra.mxu0 %v845
  %886 = vmatprep.subr.mxu0 0.0
  %887 = vmatpush1.msra.mxu0 %v846
  %888 = vmatprep.subr.mxu0 0.0
  %889 = vmatpush1.msra.mxu0 %v847
  %890 = vmatprep.subr.mxu0 0.0
  %891 = vmatpush1.msra.mxu0 %v848
  %892 = vmatprep.subr.mxu0 0.0
  %893 = vmatpush1.msra.mxu0 %v849
  %894 = vmatprep.subr.mxu0 0.0
  %895 = vmatpush1.msra.mxu0 %v850
  %896 = vmatprep.subr.mxu0 0.0
  %897 = vmatpush1.msra.mxu0 %v851
  %898 = vmatprep.subr.mxu0 0.0
  %899 = vmatpush1.msra.mxu0 %v852
  %900 = vmatprep.subr.mxu0 0.0
  %901 = vmatpush1.msra.mxu0 %v853
  %902 = vmatprep.subr.mxu0 0.0
  %903 = vmatpush1.msra.mxu0 %v854
  %904 = vmatprep.subr.mxu0 0.0
  %905 = vmatpush1.msra.mxu0 %v855
  %906 = vmatprep.subr.mxu0 0.0
  %907 = vmatpush1.msra.mxu0 %v856
  %908 = vmatprep.subr.mxu0 0.0
  %909 = vmatpush1.msra.mxu0 %v857
  %910 = vmatprep.subr.mxu0 0.0
  %911 = vmatpush1.msra.mxu0 %v858
  %912 = vmatprep.subr.mxu0 0.0
  %913 = vmatpush1.msra.mxu0 %v859
  %914 = vmatprep.subr.mxu0 0.0
  %915 = vmatpush1.msra.mxu0 %v860
  %916 = vmatprep.subr.mxu0 0.0
  %917 = vmatpush1.msra.mxu0 %v861
  %918 = vmatprep.subr.mxu0 0.0
  %919 = vmatpush1.msra.mxu0 %v862
  %920 = vmatprep.subr.mxu0 0.0
  %921 = vmatpush1.msra.mxu0 %v863
  %922 = vmatprep.subr.mxu0 0.0
  %923 = vmatpush1.msra.mxu0 %v864
  %924 = vmatprep.subr.mxu0 0.0
  %925 = vmatpush1.msra.mxu0 %v865
  %926 = vmatprep.subr.mxu0 0.0
  %927 = vmatpush1.msra.mxu0 %v866
  %928 = vmatprep.subr.mxu0 0.0
  %929 = vmatpush1.msra.mxu0 %v867
  %930 = vmatprep.subr.mxu0 0.0
  %931 = vmatpush1.msra.mxu0 %v868
  %932 = vmatprep.subr.mxu0 0.0
  %933 = vmatpush1.msra.mxu0 %v869
  %934 = vmatprep.subr.mxu0 0.0
  %935 = vmatpush1.msra.mxu0 %v870
  %936 = vmatprep.subr.mxu0 0.0
  %937 = vmatpush1.msra.mxu0 %v871
  %938 = vmatprep.subr.mxu0 0.0
  %939 = vmatpush1.msra.mxu0 %v872
  %940 = vmatprep.subr.mxu0 0.0
  %941 = vmatpush1.msra.mxu0 %v873
  %942 = vmatprep.subr.mxu0 0.0
  %943 = vmatpush1.msra.mxu0 %v874
  %944 = vmatprep.subr.mxu0 0.0
  %945 = vmatpush1.msra.mxu0 %v875
  %946 = vmatprep.subr.mxu0 0.0
  %947 = vmatpush1.msra.mxu0 %v876
  %948 = vmatprep.mubr.f32.mxu0 %v844
  %949 = vmatmul.mubr.f32.gmra.mrb[0].mxu0 %v841
  %v950 = vpop.f32.mrb[0].mxu0
  %v951 = vadd.f32 %v882, %v950
  %v952 = vpop.f32.mrb[0].mxu0
  %953 = vdwg.mxu0
  %v954 = vtanh.pop %v951
  %956 = vrot.lane.b32.xlu0 %v954, 32
  %v957 = vpop.permute.xlu0 %956
  %960 = vrot.lane.b32.xlu0 %v144, 64
  %v961 = vpop.permute.xlu0 %960
  %v963 = vsel %vm166, %v141, %v957
  %v964 = vsel %vm70, %v963, %v961
  %v965 = vld [vmem:[%s10] sm:$0xff]
  %v966 = vld [vmem:[%s10 + $0x8] sm:$0xff]
  %v967 = vld [vmem:[%s10 + $0x10] sm:$0xff]
  %v968 = vld [vmem:[%s10 + $0x18] sm:$0xff]
  %v969 = vld [vmem:[%s10 + $0x20] sm:$0xff]
  %v970 = vld [vmem:[%s10 + $0x28] sm:$0xff]
  %v971 = vld [vmem:[%s10 + $0x30] sm:$0xff]
  %v972 = vld [vmem:[%s10 + $0x38] sm:$0xff]
  %v973 = vld [vmem:[%s10 + $0x40] sm:$0xff]
  %v974 = vld [vmem:[%s10 + $0x48] sm:$0xff]
  %v975 = vld [vmem:[%s10 + $0x50] sm:$0xff]
  %v976 = vld [vmem:[%s10 + $0x58] sm:$0xff]
  %v977 = vld [vmem:[%s10 + $0x60] sm:$0xff]
  %v978 = vld [vmem:[%s10 + $0x68] sm:$0xff]
  %v979 = vld [vmem:[%s10 + $0x70] sm:$0xff]
  %v980 = vld [vmem:[%s10 + $0x78] sm:$0xff]
  %v981 = vld [vmem:[%s10 + $0x80] sm:$0xff]
  %v982 = vld [vmem:[%s10 + $0x88] sm:$0xff]
  %v983 = vld [vmem:[%s10 + $0x90] sm:$0xff]
  %v984 = vld [vmem:[%s10 + $0x98] sm:$0xff]
  %v985 = vld [vmem:[%s10 + $0xa0] sm:$0xff]
  %v986 = vld [vmem:[%s10 + $0xa8] sm:$0xff]
  %v987 = vld [vmem:[%s10 + $0xb0] sm:$0xff]
  %v988 = vld [vmem:[%s10 + $0xb8] sm:$0xff]
  %v989 = vld [vmem:[%s11] sm:$0x3]
  %v991 = vlaneseq
  %v992 = vshrl.u32 %v991, 7
  %v993 = vsub.s32 0, %v992
  %v994 = vrot.slane %v989, %v993
  %v995 = vlaneseq
  %v996 = vshrl.u32 %v995, 7
  %v997 = vsub.s32 1, %v996
  %v998 = vrot.slane %v989, %v997
  %v1002 = vsel %vm840, %v964, 0
  %1004 = vmatprep.subr.mxu0 %v966
  %1005 = vmatpush1.msra.mxu0 %v965
  %1006 = vmatprep.subr.mxu0 %v968
  %1007 = vmatpush1.msra.mxu0 %v967
  %1008 = vmatprep.subr.mxu0 %v970
  %1009 = vmatpush1.msra.mxu0 %v969
  %1010 = vmatprep.subr.mxu0 %v972
  %1011 = vmatpush1.msra.mxu0 %v971
  %1012 = vmatprep.subr.mxu0 %v974
  %1013 = vmatpush1.msra.mxu0 %v973
  %1014 = vmatprep.subr.mxu0 %v976
  %1015 = vmatpush1.msra.mxu0 %v975
  %1016 = vmatprep.subr.mxu0 %v978
  %1017 = vmatpush1.msra.mxu0 %v977
  %1018 = vmatprep.subr.mxu0 %v980
  %1019 = vmatpush1.msra.mxu0 %v979
  %1020 = vmatprep.subr.mxu0 %v982
  %1021 = vmatpush1.msra.mxu0 %v981
  %1022 = vmatprep.subr.mxu0 %v984
  %1023 = vmatpush1.msra.mxu0 %v983
  %1024 = vmatprep.subr.mxu0 %v986
  %1025 = vmatpush1.msra.mxu0 %v985
  %1026 = vmatprep.subr.mxu0 %v988
  %1027 = vmatpush1.msra.mxu0 %v987
  %1028 = vmatprep.subr.mxu0 0.0
  %1029 = vmatpush1.msra.mxu0 0.0
  %1030 = vmatprep.subr.mxu0 0.0
  %1031 = vmatpush1.msra.mxu0 0.0
  %1032 = vmatprep.subr.mxu0 0.0
  %1033 = vmatpush1.msra.mxu0 0.0
  %1034 = vmatprep.subr.mxu0 0.0
  %1035 = vmatpush1.msra.mxu0 0.0
  %1036 = vmatprep.subr.mxu0 0.0
  %1037 = vmatpush1.msra.mxu0 0.0
  %1038 = vmatprep.subr.mxu0 0.0
  %1039 = vmatpush1.msra.mxu0 0.0
  %1040 = vmatprep.subr.mxu0 0.0
  %1041 = vmatpush1.msra.mxu0 0.0
  %1042 = vmatprep.subr.mxu0 0.0
  %1043 = vmatpush1.msra.mxu0 0.0
  %1044 = vmatprep.subr.mxu0 0.0
  %1045 = vmatpush1.msra.mxu0 0.0
  %1046 = vmatprep.subr.mxu0 0.0
  %1047 = vmatpush1.msra.mxu0 0.0
  %1048 = vmatprep.subr.mxu0 0.0
  %1049 = vmatpush1.msra.mxu0 0.0
  %1050 = vmatprep.subr.mxu0 0.0
  %1051 = vmatpush1.msra.mxu0 0.0
  %1052 = vmatprep.subr.mxu0 0.0
  %1053 = vmatpush1.msra.mxu0 0.0
  %1054 = vmatprep.subr.mxu0 0.0
  %1055 = vmatpush1.msra.mxu0 0.0
  %1056 = vmatprep.subr.mxu0 0.0
  %1057 = vmatpush1.msra.mxu0 0.0
  %1058 = vmatprep.subr.mxu0 0.0
  %1059 = vmatpush1.msra.mxu0 0.0
  %1060 = vmatprep.subr.mxu0 0.0
  %1061 = vmatpush1.msra.mxu0 0.0
  %1062 = vmatprep.subr.mxu0 0.0
  %1063 = vmatpush1.msra.mxu0 0.0
  %1064 = vmatprep.subr.mxu0 0.0
  %1065 = vmatpush1.msra.mxu0 0.0
  %1066 = vmatprep.subr.mxu0 0.0
  %1067 = vmatpush1.msra.mxu0 0.0
  %1068 = vmatprep.mubr.f32.mxu0 0.0
  %1069 = vmatmul.mubr.f32.gmra.mrb[0].mxu0 %v1002
  %v1070 = vpop.f32.mrb[0].mxu0
  %v1071 = vadd.f32 %v994, %v1070
  %v1072 = vpop.f32.mrb[0].mxu0
  %v1073 = vadd.f32 %v998, %v1072
  %1074 = vdwg.mxu0
  %v1075 = vadd.f32 %v1071, %v1073
  %v1076 = vxor.u32 %v1075, 2147483648
  %v1077 = vmul.f32 %v1076, 1.442695
  %v1078 = vpow.pop %v1077
  %v1079 = vadd.f32 %v1078, 1.0
  %v1080 = vrcp.pop %v1079
  %v1081 = vmul.f32 1.0, %v1080
  %1083 = vrot.lane.b32.xlu0 %v1073, 64
  %v1084 = vpop.permute.xlu0 %1083
  %v1086 = vmul.f32 %v1081, %v1084
  %1088 = vrot.lane.b32.xlu0 %v1086, 64
  %v1089 = vpop.permute.xlu0 %1088
  %v1091 = vadd.f32 %v1071, %v1089
  %v1092 = vtanh.pop %v1091
  %v1093 = vsub.f32 1.0, %v1081
  %1095 = vrot.lane.b32.xlu0 %v1092, 96
  %v1096 = vpop.permute.xlu0 %1095
  %v1098 = vmul.f32 %v1093, %v1096
  %1099 = vrot.lane.b32.xlu0 %v144, 32
  %v1100 = vpop.permute.xlu0 %1099
  %v1102 = vmul.f32 %v1081, %v1100
  %v1103 = vadd.f32 %v1098, %v1102
  %1105 = vrot.lane.b32.xlu0 %v1103, 96
  %v1106 = vpop.permute.xlu0 %1105
  %1109 = vrot.lane.b32.xlu0 %v145, 32
  %v1110 = vpop.permute.xlu0 %1109
  %v1112 = vsel %vm166, %v1106, %v1110
  %v1113 = vld [vmem:[%s12] sm:$0xff]
  %v1114 = vld [vmem:[%s12 + $0x8] sm:$0xff]
  %v1115 = vld [vmem:[%s12 + $0x10] sm:$0xff]
  %v1116 = vld [vmem:[%s12 + $0x18] sm:$0xff]
  %v1117 = vld [vmem:[%s12 + $0x20] sm:$0xff]
  %v1118 = vld [vmem:[%s12 + $0x28] sm:$0xff]
  %v1119 = vld [vmem:[%s12 + $0x30] sm:$0xff]
  %v1120 = vld [vmem:[%s12 + $0x38] sm:$0xff]
  %v1121 = vld [vmem:[%s12 + $0x40] sm:$0xff]
  %v1122 = vld [vmem:[%s12 + $0x48] sm:$0xff]
  %v1123 = vld [vmem:[%s12 + $0x50] sm:$0xff]
  %v1124 = vld [vmem:[%s12 + $0x58] sm:$0xff]
  %v1125 = vld [vmem:[%s12 + $0x60] sm:$0xff]
  %v1126 = vld [vmem:[%s12 + $0x68] sm:$0xff]
  %v1127 = vld [vmem:[%s12 + $0x70] sm:$0xff]
  %v1128 = vld [vmem:[%s12 + $0x78] sm:$0xff]
  %v1129 = vld [vmem:[%s13] sm:$0x3]
  %v1131 = vlaneseq
  %v1132 = vshrl.u32 %v1131, 7
  %v1133 = vsub.s32 0, %v1132
  %v1134 = vrot.slane %v1129, %v1133
  %v1135 = vlaneseq
  %v1136 = vshrl.u32 %v1135, 7
  %v1137 = vsub.s32 1, %v1136
  %v1138 = vrot.slane %v1129, %v1137
  %v1142 = vsel %vm70, %v1112, 0
  %1144 = vmatprep.subr.mxu0 %v1114
  %1145 = vmatpush1.msra.mxu0 %v1113
  %1146 = vmatprep.subr.mxu0 %v1116
  %1147 = vmatpush1.msra.mxu0 %v1115
  %1148 = vmatprep.subr.mxu0 %v1118
  %1149 = vmatpush1.msra.mxu0 %v1117
  %1150 = vmatprep.subr.mxu0 %v1120
  %1151 = vmatpush1.msra.mxu0 %v1119
  %1152 = vmatprep.subr.mxu0 %v1122
  %1153 = vmatpush1.msra.mxu0 %v1121
  %1154 = vmatprep.subr.mxu0 %v1124
  %1155 = vmatpush1.msra.mxu0 %v1123
  %1156 = vmatprep.subr.mxu0 %v1126
  %1157 = vmatpush1.msra.mxu0 %v1125
  %1158 = vmatprep.subr.mxu0 %v1128
  %1159 = vmatpush1.msra.mxu0 %v1127
  %1160 = vmatprep.subr.mxu0 0.0
  %1161 = vmatpush1.msra.mxu0 0.0
  %1162 = vmatprep.subr.mxu0 0.0
  %1163 = vmatpush1.msra.mxu0 0.0
  %1164 = vmatprep.subr.mxu0 0.0
  %1165 = vmatpush1.msra.mxu0 0.0
  %1166 = vmatprep.subr.mxu0 0.0
  %1167 = vmatpush1.msra.mxu0 0.0
  %1168 = vmatprep.subr.mxu0 0.0
  %1169 = vmatpush1.msra.mxu0 0.0
  %1170 = vmatprep.subr.mxu0 0.0
  %1171 = vmatpush1.msra.mxu0 0.0
  %1172 = vmatprep.subr.mxu0 0.0
  %1173 = vmatpush1.msra.mxu0 0.0
  %1174 = vmatprep.subr.mxu0 0.0
  %1175 = vmatpush1.msra.mxu0 0.0
  %1176 = vmatprep.subr.mxu0 0.0
  %1177 = vmatpush1.msra.mxu0 0.0
  %1178 = vmatprep.subr.mxu0 0.0
  %1179 = vmatpush1.msra.mxu0 0.0
  %1180 = vmatprep.subr.mxu0 0.0
  %1181 = vmatpush1.msra.mxu0 0.0
  %1182 = vmatprep.subr.mxu0 0.0
  %1183 = vmatpush1.msra.mxu0 0.0
  %1184 = vmatprep.subr.mxu0 0.0
  %1185 = vmatpush1.msra.mxu0 0.0
  %1186 = vmatprep.subr.mxu0 0.0
  %1187 = vmatpush1.msra.mxu0 0.0
  %1188 = vmatprep.subr.mxu0 0.0
  %1189 = vmatpush1.msra.mxu0 0.0
  %1190 = vmatprep.subr.mxu0 0.0
  %1191 = vmatpush1.msra.mxu0 0.0
  %1192 = vmatprep.subr.mxu0 0.0
  %1193 = vmatpush1.msra.mxu0 0.0
  %1194 = vmatprep.subr.mxu0 0.0
  %1195 = vmatpush1.msra.mxu0 0.0
  %1196 = vmatprep.subr.mxu0 0.0
  %1197 = vmatpush1.msra.mxu0 0.0
  %1198 = vmatprep.subr.mxu0 0.0
  %1199 = vmatpush1.msra.mxu0 0.0
  %1200 = vmatprep.subr.mxu0 0.0
  %1201 = vmatpush1.msra.mxu0 0.0
  %1202 = vmatprep.subr.mxu0 0.0
  %1203 = vmatpush1.msra.mxu0 0.0
  %1204 = vmatprep.subr.mxu0 0.0
  %1205 = vmatpush1.msra.mxu0 0.0
  %1206 = vmatprep.subr.mxu0 0.0
  %1207 = vmatpush1.msra.mxu0 0.0
  %1208 = vmatprep.mubr.f32.mxu0 0.0
  %1209 = vmatmul.mubr.f32.gmra.mrb[0].mxu0 %v1142
  %v1210 = vpop.f32.mrb[0].mxu0
  %v1211 = vadd.f32 %v1134, %v1210
  %v1212 = vpop.f32.mrb[0].mxu0
  %v1213 = vadd.f32 %v1138, %v1212
  %1214 = vdwg.mxu0
  %v1215 = vadd.f32 %v1211, %v1213
  %v1216 = vxor.u32 %v1215, 2147483648
  %v1217 = vmul.f32 %v1216, 1.442695
  %v1218 = vpow.pop %v1217
  %v1219 = vadd.f32 %v1218, 1.0
  %v1220 = vrcp.pop %v1219
  %v1221 = vmul.f32 1.0, %v1220
  %1223 = vrot.lane.b32.xlu0 %v1213, 64
  %v1224 = vpop.permute.xlu0 %1223
  %v1226 = vmul.f32 %v1221, %v1224
  %1228 = vrot.lane.b32.xlu0 %v1226, 64
  %v1229 = vpop.permute.xlu0 %1228
  %v1231 = vadd.f32 %v1211, %v1229
  %v1232 = vtanh.pop %v1231
  %v1233 = vsub.f32 1.0, %v1221
  %1235 = vrot.lane.b32.xlu0 %v1232, 96
  %v1236 = vpop.permute.xlu0 %1235
  %v1238 = vmul.f32 %v1233, %v1236
  %v1239 = vmul.f32 %v1221, %v1110
  %v1240 = vadd.f32 %v1238, %v1239
  %v1241 = vld [vmem:[%s14] sm:$0xff]
  %v1242 = vld [vmem:[%s14 + $0x8] sm:$0xff]
  %v1243 = vld [vmem:[%s14 + $0x10] sm:$0xff]
  %v1244 = vld [vmem:[%s14 + $0x18] sm:$0xff]
  %v1245 = vld [vmem:[%s15] sm:$0x1]
  %v1247 = vlaneseq
  %v1248 = vshrl.u32 %v1247, 7
  %v1249 = vsub.s32 0, %v1248
  %v1250 = vrot.slane %v1245, %v1249
  %1253 = vrot.lane.b32.xlu0 %v1240, 96
  %v1254 = vpop.permute.xlu0 %1253
  %v1255 = vsel %vm166, %v1254, 0
  %1257 = vmatprep.subr.mxu0 0.0
  %1258 = vmatpush1.msra.mxu0 %v1241
  %1259 = vmatprep.subr.mxu0 0.0
  %1260 = vmatpush1.msra.mxu0 %v1242
  %1261 = vmatprep.subr.mxu0 0.0
  %1262 = vmatpush1.msra.mxu0 %v1243
  %1263 = vmatprep.subr.mxu0 0.0
  %1264 = vmatpush1.msra.mxu0 %v1244
  %1265 = vmatprep.subr.mxu0 0.0
  %1266 = vmatpush1.msra.mxu0 0.0
  %1267 = vmatprep.subr.mxu0 0.0
  %1268 = vmatpush1.msra.mxu0 0.0
  %1269 = vmatprep.subr.mxu0 0.0
  %1270 = vmatpush1.msra.mxu0 0.0
  %1271 = vmatprep.subr.mxu0 0.0
  %1272 = vmatpush1.msra.mxu0 0.0
  %1273 = vmatprep.subr.mxu0 0.0
  %1274 = vmatpush1.msra.mxu0 0.0
  %1275 = vmatprep.subr.mxu0 0.0
  %1276 = vmatpush1.msra.mxu0 0.0
  %1277 = vmatprep.subr.mxu0 0.0
  %1278 = vmatpush1.msra.mxu0 0.0
  %1279 = vmatprep.subr.mxu0 0.0
  %1280 = vmatpush1.msra.mxu0 0.0
  %1281 = vmatprep.subr.mxu0 0.0
  %1282 = vmatpush1.msra.mxu0 0.0
  %1283 = vmatprep.subr.mxu0 0.0
  %1284 = vmatpush1.msra.mxu0 0.0
  %1285 = vmatprep.subr.mxu0 0.0
  %1286 = vmatpush1.msra.mxu0 0.0
  %1287 = vmatprep.subr.mxu0 0.0
  %1288 = vmatpush1.msra.mxu0 0.0
  %1289 = vmatprep.subr.mxu0 0.0
  %1290 = vmatpush1.msra.mxu0 0.0
  %1291 = vmatprep.subr.mxu0 0.0
  %1292 = vmatpush1.msra.mxu0 0.0
  %1293 = vmatprep.subr.mxu0 0.0
  %1294 = vmatpush1.msra.mxu0 0.0
  %1295 = vmatprep.subr.mxu0 0.0
  %1296 = vmatpush1.msra.mxu0 0.0
  %1297 = vmatprep.subr.mxu0 0.0
  %1298 = vmatpush1.msra.mxu0 0.0
  %1299 = vmatprep.subr.mxu0 0.0
  %1300 = vmatpush1.msra.mxu0 0.0
  %1301 = vmatprep.subr.mxu0 0.0
  %1302 = vmatpush1.msra.mxu0 0.0
  %1303 = vmatprep.subr.mxu0 0.0
  %1304 = vmatpush1.msra.mxu0 0.0
  %1305 = vmatprep.subr.mxu0 0.0
  %1306 = vmatpush1.msra.mxu0 0.0
  %1307 = vmatprep.subr.mxu0 0.0
  %1308 = vmatpush1.msra.mxu0 0.0
  %1309 = vmatprep.subr.mxu0 0.0
  %1310 = vmatpush1.msra.mxu0 0.0
  %1311 = vmatprep.subr.mxu0 0.0
  %1312 = vmatpush1.msra.mxu0 0.0
  %1313 = vmatprep.subr.mxu0 0.0
  %1314 = vmatpush1.msra.mxu0 0.0
  %1315 = vmatprep.subr.mxu0 0.0
  %1316 = vmatpush1.msra.mxu0 0.0
  %1317 = vmatprep.subr.mxu0 0.0
  %1318 = vmatpush1.msra.mxu0 0.0
  %1319 = vmatprep.subr.mxu0 0.0
  %1320 = vmatpush1.msra.mxu0 0.0
  %1321 = vmatprep.mubr.f32.mxu0 0.0
  %1322 = vmatmul.mubr.f32.gmra.mrb[0].mxu0 %v1255
  %v1323 = vpop.f32.mrb[0].mxu0
  %v1324 = vadd.f32 %v1250, %v1323
  %v1325 = vpop.f32.mrb[0].mxu0
  %1326 = vdwg.mxu0
  %vm1327 = vcmask 519168
  %v1328 = vsel %vm1327, %v1324, -inf
  %1329 = vmax.xlane.f32.xlu0 %v1328
  %v1330 = vpop.xlane.xlu0 %1329
  %v1331 = vsub.f32 %v1324, %v1330
  %v1332 = vmul.f32 %v1331, 1.442695
  %v1333 = vpow.pop %v1332
  %v1334 = vsel %vm1327, %v1333, 0.0
  %1335 = vadd.xlane.f32.xlu0 %v1334
  %v1336 = vpop.xlane.xlu0 %1335
  %v1337 = vlog2.pop %v1336
  %v1338 = vmul.f32 %v1337, 0.6931472
  %v1339 = vsub.f32 %v1331, %v1338
  %1340 = vrot.lane.b32.xlu0 %v1103, 32
  %v1341 = vpop.permute.xlu0 %1340
  %1343 = vrot.lane.b32.xlu0 %v1240, 64
  %v1344 = vpop.permute.xlu0 %1343
  %v1346 = vsel %vm70, %v1339, %v1341
  %v1347 = vsel %vm840, %v1346, %v1344
  %1348 = vst [vmem:[%s16] sm:$0xf] %v1347
  // Predicated region
  $region66: #{decoder_forward.1} parent=0 // pred_check
    _
  $region67: #{decoder_forward.1} parent=0 // pred_check_branch
    %1350 = sbr.rel (0) target = $region69
  $region68: #{decoder_forward.1} parent=0 // pred_region
    _
  $region69: #{decoder_forward.1} parent=0 // pred_fallthru
    _
  // Predicated region
  $region70: #{decoder_forward.1} parent=0 // pred_check
    _
  $region71: #{decoder_forward.1} parent=0 // pred_check_branch
    %1352 = sbr.rel (0) target = $region73
  $region72: #{decoder_forward.1} parent=0 // pred_region
    _
  $region73: #{decoder_forward.1} parent=0 // pred_fallthru
    _

</llo_original>
